<compile_context>
chip_gen: v6e
topology: v6e:2x2x1
jax: 0.10.0
libtpu: 0.0.40
codegen_flags: <defaults>
</compile_context>

<pallas_src>
import functools

import jax
import jax.numpy as jnp
from jax.experimental import pallas as pl
from jax.experimental.pallas import tpu as pltpu


def _round_up(x, m):
    return (x + m - 1) // m * m


def encode_bs_kernel(x_ref, w_ref, b_ref, o_ref, acc_ref):
    """One (n-tile, k-tile) grid step of relu(x @ W^T + b).

    x_ref:   (B, tk)      activation slice (full batch, K-slice)
    w_ref:   (tn, tk)     weight tile in PyTorch (out_features, in_features) layout
    b_ref:   (1, tn)      bias tile
    o_ref:   (B, tn)      output tile (lane-dense)
    acc_ref: (B, tn) f32  accumulator, persists across the K grid axis
    """
    k = pl.program_id(1)

    @pl.when(k == 0)
    def _init():
        acc_ref[...] = jnp.zeros_like(acc_ref)

    # x @ W^T on the MXU: contract the last axis of both operands
    # (rhs-transposed matmul, same pattern as jnp.dot(a, b.T) on 2-D tiles).
    acc_ref[...] += jax.lax.dot_general(
        x_ref[...], w_ref[...],
        dimension_numbers=(((1,), (1,)), ((), ())),
        preferred_element_type=jnp.float32,
    )

    @pl.when(k == pl.num_programs(1) - 1)
    def _finalize():
        y = acc_ref[...] + b_ref[...].astype(jnp.float32)
        o_ref[...] = jnp.maximum(y, 0.0).astype(o_ref.dtype)  # fused bias + ReLU


@functools.partial(jax.jit, static_argnames=("num_output_channels",))
def encode_bs(x, weight, bias, num_output_channels=8):
    """Pallas implementation of EncodeBS.forward.

    x:      (B, K)   input
    weight: (N, K)   PyTorch nn.Linear weight layout (out_features, in_features)
    bias:   (N,)
    returns (B, num_output_channels, N // num_output_channels)
    """
    B, K = x.shape
    N, K_w = weight.shape
    assert K_w == K and N % num_output_channels == 0

    # --- tile sizes ---
    tn = min(N, 1024)                  # lane-dense output tile (multiple of 128)
    assert N % tn == 0

    # K padded to the lane quantum; single K step when it comfortably fits,
    # otherwise stream 512-wide K slices through the pipeline.
    Kp = _round_up(K, 128)
    if Kp > 2048:
        tk = 512
        Kp = _round_up(K, tk)
    else:
        tk = Kp

    if Kp != K:
        # Zero-pad the contraction dim (zeros do not change the matmul result).
        x = jnp.pad(x, ((0, 0), (0, Kp - K)))
        weight = jnp.pad(weight, ((0, 0), (0, Kp - K)))

    bias2d = bias.reshape(1, N)

    grid = (N // tn, Kp // tk)   # reduction (K) axis last

    out_flat = pl.pallas_call(
        encode_bs_kernel,
        out_shape=jax.ShapeDtypeStruct((B, N), x.dtype),
        grid=grid,
        in_specs=[
            pl.BlockSpec((B, tk), lambda j, k: (0, k)),    # activations
            pl.BlockSpec((tn, tk), lambda j, k: (j, k)),   # weight (out, in)
            pl.BlockSpec((1, tn), lambda j, k: (0, j)),    # bias
        ],
        out_specs=pl.BlockSpec((B, tn), lambda j, k: (0, j)),
        scratch_shapes=[pltpu.VMEM((B, tn), jnp.float32)],
        compiler_params=pltpu.CompilerParams(
            dimension_semantics=("parallel", "arbitrary"),
            vmem_limit_bytes=32 * 1024 * 1024,
        ),
    )(x, weight, bias2d)

    # x.reshape(B, C, -1): contiguous split of the feature axis (metadata only).
    return out_flat.reshape(B, num_output_channels, N // num_output_channels)


def ref_encode_bs(x, weight, bias, num_output_channels):
    """Pure-JAX reference mirroring the PyTorch forward."""
    y = x @ weight.T + bias
    y = jnp.maximum(y, 0.0)
    return y.reshape(x.shape[0], num_output_channels, -1)


if __name__ == "__main__":
    # Small-but-representative EncodeBS config. Note 1024 * num_output_channels
    # output features are fixed by the module definition; input_size is kept
    # small and deliberately NOT a multiple of 128 to exercise the padding path.
    B = 8
    input_size = 760
    num_output_channels = 8
    N = 1024 * num_output_channels   # 8192

    key = jax.random.PRNGKey(0)
    kx, kw, kb = jax.random.split(key, 3)

    x = jax.random.normal(kx, (B, input_size), dtype=jnp.float32)
    # PyTorch nn.Linear default init: U(-1/sqrt(fan_in), 1/sqrt(fan_in))
    bound = 1.0 / (input_size ** 0.5)
    weight = jax.random.uniform(kw, (N, input_size), jnp.float32, -bound, bound)
    bias = jax.random.uniform(kb, (N,), jnp.float32, -bound, bound)

    out = encode_bs(x, weight, bias, num_output_channels=num_output_channels)
    out = jax.block_until_ready(out)

    ref = ref_encode_bs(x, weight, bias, num_output_channels)
    assert out.shape == (B, num_output_channels, N // num_output_channels)
    max_err = float(jnp.max(jnp.abs(out - ref)))
    assert jnp.allclose(out, ref, atol=1e-2, rtol=1e-2), \
        f"mismatch vs reference (max abs err {max_err})"

    print("KERNEL_OK")
</pallas_src>

<mosaic_0001>
module attributes {stable_mosaic.version = 11 : i64} {
  func.func @encode_bs_kernel(%arg0: i32, %arg1: i32, %arg2: memref<8x768xf32, #tpu.memory_space<vmem>>, %arg3: memref<1024x768xf32, #tpu.memory_space<vmem>>, %arg4: memref<1x1024xf32, #tpu.memory_space<vmem>>, %arg5: memref<8x1024xf32, #tpu.memory_space<vmem>>, %arg6: memref<8x1024xf32, #tpu.memory_space<vmem>>) attributes {dimension_semantics = [#tpu.dimension_semantics<parallel>, #tpu.dimension_semantics<arbitrary>], iteration_bounds = array<i64: 8, 1>, scalar_prefetch = 0 : i64, scratch_operands = 1 : i64, tpu.core_type = #tpu.core_type<tc>, window_params = [{transform_indices = @transform_0, window_bounds = array<i64: 8, 768>}, {transform_indices = @transform_1, window_bounds = array<i64: 1024, 768>}, {transform_indices = @transform_2, window_bounds = array<i64: 1, 1024>}, {transform_indices = @transform_3, window_bounds = array<i64: 8, 1024>}]} {
    %c0_i32 = arith.constant 0 : i32
    %0 = arith.cmpi eq, %arg1, %c0_i32 : i32
    %1 = arith.extui %0 : i1 to i32
    %c0_i32_0 = arith.constant 0 : i32
    %2 = arith.cmpi ne, %1, %c0_i32_0 : i32
    scf.if %2 {
      %cst_10 = arith.constant 0.000000e+00 : f32
      %12 = vector.broadcast %cst_10 : f32 to vector<8x1024xf32>
      %c0_11 = arith.constant 0 : index
      %c0_12 = arith.constant 0 : index
      %13 = vector.load %arg6[%c0_11, %c0_12] : memref<8x1024xf32, #tpu.memory_space<vmem>>, vector<8x1024xf32>
      tpu.vector_store %arg6[%c0_11, %c0_12], %12 {strides = array<i32>} : memref<8x1024xf32, #tpu.memory_space<vmem>>, vector<8x1024xf32>,
    } else {
    }
    %c0 = arith.constant 0 : index
    %c0_1 = arith.constant 0 : index
    %3 = vector.load %arg6[%c0, %c0_1] : memref<8x1024xf32, #tpu.memory_space<vmem>>, vector<8x1024xf32>
    %c0_2 = arith.constant 0 : index
    %c0_3 = arith.constant 0 : index
    %4 = vector.load %arg2[%c0_2, %c0_3] : memref<8x768xf32, #tpu.memory_space<vmem>>, vector<8x768xf32>
    %c0_4 = arith.constant 0 : index
    %c0_5 = arith.constant 0 : index
    %5 = vector.load %arg3[%c0_4, %c0_5] : memref<1024x768xf32, #tpu.memory_space<vmem>>, vector<1024x768xf32>
    %cst = arith.constant dense<0.000000e+00> : vector<8x1024xf32>
    %6 = tpu.matmul %4, %5, %cst {dimension_numbers = #tpu.dot_dimension_numbers<[1], [1], [0], [0], [0, 0, 1, 0], [], []>} : vector<8x768xf32>, vector<1024x768xf32>, vector<8x1024xf32> -> vector<8x1024xf32>
    %7 = arith.addf %3, %6 : vector<8x1024xf32>
    %c0_6 = arith.constant 0 : index
    %c0_7 = arith.constant 0 : index
    %8 = vector.load %arg6[%c0_6, %c0_7] : memref<8x1024xf32, #tpu.memory_space<vmem>>, vector<8x1024xf32>
    tpu.vector_store %arg6[%c0_6, %c0_7], %7 {strides = array<i32>} : memref<8x1024xf32, #tpu.memory_space<vmem>>, vector<8x1024xf32>,
    %c0_i32_8 = arith.constant 0 : i32
    %9 = arith.cmpi eq, %arg1, %c0_i32_8 : i32
    %10 = arith.extui %9 : i1 to i32
    %c0_i32_9 = arith.constant 0 : i32
    %11 = arith.cmpi ne, %10, %c0_i32_9 : i32
    scf.if %11 {
      %c0_10 = arith.constant 0 : index
      %c0_11 = arith.constant 0 : index
      %12 = vector.load %arg6[%c0_10, %c0_11] : memref<8x1024xf32, #tpu.memory_space<vmem>>, vector<8x1024xf32>
      %c0_12 = arith.constant 0 : index
      %c0_13 = arith.constant 0 : index
      %13 = vector.load %arg4[%c0_12, %c0_13] : memref<1x1024xf32, #tpu.memory_space<vmem>>, vector<1x1024xf32>
      %14 = vector.broadcast %13 : vector<1x1024xf32> to vector<8x1024xf32>
      %15 = arith.addf %12, %14 : vector<8x1024xf32>
      %cst_14 = arith.constant 0.000000e+00 : f32
      %16 = vector.broadcast %cst_14 : f32 to vector<8x1024xf32>
      %17 = arith.maximumf %15, %16 : vector<8x1024xf32>
      %c0_15 = arith.constant 0 : index
      %c0_16 = arith.constant 0 : index
      %18 = vector.load %arg5[%c0_15, %c0_16] : memref<8x1024xf32, #tpu.memory_space<vmem>>, vector<8x1024xf32>
      tpu.vector_store %arg5[%c0_15, %c0_16], %17 {strides = array<i32>} : memref<8x1024xf32, #tpu.memory_space<vmem>>, vector<8x1024xf32>,
    } else {
    }
    return
  }
  func.func @transform_0(%arg0: i32, %arg1: i32) -> (i32, i32) {
    %c0_i32 = arith.constant 0 : i32
    %c0_i32_0 = arith.constant 0 : i32
    return %c0_i32, %arg1 : i32, i32
  }
  func.func @transform_1(%arg0: i32, %arg1: i32) -> (i32, i32) {
    %c0_i32 = arith.constant 0 : i32
    return %arg0, %arg1 : i32, i32
  }
  func.func @transform_2(%arg0: i32, %arg1: i32) -> (i32, i32) {
    %c0_i32 = arith.constant 0 : i32
    %c0_i32_0 = arith.constant 0 : i32
    return %c0_i32, %arg0 : i32, i32
  }
  func.func @transform_3(%arg0: i32, %arg1: i32) -> (i32, i32) {
    %c0_i32 = arith.constant 0 : i32
    %c0_i32_0 = arith.constant 0 : i32
    return %c0_i32, %arg0 : i32, i32
  }
}

</mosaic_0001>

<llo_original>
// kernel: encode_bs.1
$region0: #{encode_bs.1}
  #allocation0 [shape = 'u32[]', space=smem, size = 0x4, offset = 0x4, fixed_abs, tag = 'smem constant byte address 0x4 - core index']
  #allocation1 [shape = 'u32[144,128]{1,0:T(1,128)}', space=vmem, size = 0x12000, scoped, tag = 'internal scratch']
  #allocation2 [shape = 'f32[8,1024]{1,0:T(8,128)}', space=vmem, size = 0x8000, scoped, tag = 'scratch operand']
  %s0 = inlined_call_operand.vmem [shape: f32[8,768], index: 0, kind: input, shape index: {}]
  %s1 = inlined_call_operand.vmem [shape: f32[8192,768], index: 1, kind: input, shape index: {}]
  %s2 = inlined_call_operand.vmem [shape: f32[1,8192], index: 2, kind: input, shape index: {}]
  %s3 = inlined_call_operand.vmem [shape: f32[8,8192], index: 3, kind: output, shape index: {}]
  %s4 = sld [smem:[#allocation0]]
  $region53: #{encode_bs.1} parent=0
    _
  %s6 = ssub.s32 1, %s4
  %s7 = scalar_select 0, %s6, %s4
  loop: start=0, step=1, limit=10
  $region2: #{encode_bs.1} parent=0 // loop_pre_header
    _
  $region3: #{encode_bs.1} parent=0 // loop_header
    %s9 = sphi 0, %s13
    %p10 = scmp.ge.s32.totalorder %s9, 10
    %s16 = sphi 0, %s28
    %s17 = sphi 0, %s24
    %s18 = sphi 0, %s16
    %s19 = sphi 0, %s17
    %s20 = sphi 0, %s18
    %s21 = sphi 0, %s19
    %s31 = sphi 0, %s33
    %s34 = sphi 0, %s31
    %s35 = sphi 0, %s34
    %s51 = sphi 0, %s35
    %s59 = sphi 0, %s61
    %s62 = sphi 0, %s59
    %s63 = sphi 0, %s62
    %s79 = sphi 0, %s63
    %s85 = sphi 0, %s87
    %s88 = sphi 0, %s85
    %s89 = sphi 0, %s88
    %s105 = sphi 0, %s89
    %s111 = sphi 0, %s113
    %s114 = sphi 0, %s111
    %s115 = sphi 0, %s114
    %s131 = sphi 0, %s115
  $region4: #{encode_bs.1} parent=0 // loop_header_branch
    %12 = sbr.rel (%p10) target = $region8
  $region5: #{encode_bs.1} parent=0 // loop_body
    %s14 = ssub.s32 %s9, 1
    %s15 = ssub.s32 %s9, 2
    %s22 = sadd.s32 1, %s17
    %p23 = scmp.ge.s32.totalorder %s22, 1
    %s24 = scalar_select %p23, 0, %s22
    %s25 = sadd.s32 1, %s16
    %s26 = scalar_select %p23, %s25, %s16
    %p27 = scmp.ge.s32.totalorder %s26, 8
    %s28 = scalar_select %p27, 0, %s26
    %s29 = ssub.s32 %s17, %s24
    %p30 = scmp.eq.s32.totalorder %s29, 0
    %s32 = sadd.s32 %s31, 1
    %s33 = scalar_select %p30, %s31, %s32
    %p36 = pneg %p30
    %p37 = scmp.eq.s32.totalorder %s9, 7
    %p38 = por %p36, %p37
    %p39 = scmp.ne.s32.totalorder %s31, %s34
    %p40 = scmp.eq.s32.totalorder %s9, 0
    %p41 = por %p39, %p40
    %p42 = scmp.ne.s32.totalorder %s31, %s34
    %p43 = scmp.eq.s32.totalorder %s14, 7
    %p44 = por %p42, %p43
    %p45 = scmp.ne.s32.totalorder %s34, %s35
    %p46 = scmp.eq.s32.totalorder %s14, 0
    %p47 = por %p45, %p46
    %p48 = scmp.ne.s32.totalorder %s34, %s35
    %p49 = scmp.eq.s32.totalorder %s15, 7
    %p50 = por %p48, %p49
    %p52 = scmp.ne.s32.totalorder %s35, %s51
    %p53 = scmp.eq.s32.totalorder %s15, 0
    %p54 = por %p52, %p53
    %s55 = ssub.s32 %s16, %s28
    %s56 = ssub.s32 %s17, %s24
    %s57 = sor.u32 %s55, %s56
    %p58 = scmp.eq.s32.totalorder %s57, 0
    %s60 = sadd.s32 %s59, 1
    %s61 = scalar_select %p58, %s59, %s60
    %p64 = pneg %p58
    %p65 = scmp.eq.s32.totalorder %s9, 7
    %p66 = por %p64, %p65
    %p67 = scmp.ne.s32.totalorder %s59, %s62
    %p68 = scmp.eq.s32.totalorder %s9, 0
    %p69 = por %p67, %p68
    %p70 = scmp.ne.s32.totalorder %s59, %s62
    %p71 = scmp.eq.s32.totalorder %s14, 7
    %p72 = por %p70, %p71
    %p73 = scmp.ne.s32.totalorder %s62, %s63
    %p74 = scmp.eq.s32.totalorder %s14, 0
    %p75 = por %p73, %p74
    %p76 = scmp.ne.s32.totalorder %s62, %s63
    %p77 = scmp.eq.s32.totalorder %s15, 7
    %p78 = por %p76, %p77
    %p80 = scmp.ne.s32.totalorder %s63, %s79
    %p81 = scmp.eq.s32.totalorder %s15, 0
    %p82 = por %p80, %p81
    %s83 = ssub.s32 %s16, %s28
    %p84 = scmp.eq.s32.totalorder %s83, 0
    %s86 = sadd.s32 %s85, 1
    %s87 = scalar_select %p84, %s85, %s86
    %p90 = pneg %p84
    %p91 = scmp.eq.s32.totalorder %s9, 7
    %p92 = por %p90, %p91
    %p93 = scmp.ne.s32.totalorder %s85, %s88
    %p94 = scmp.eq.s32.totalorder %s9, 0
    %p95 = por %p93, %p94
    %p96 = scmp.ne.s32.totalorder %s85, %s88
    %p97 = scmp.eq.s32.totalorder %s14, 7
    %p98 = por %p96, %p97
    %p99 = scmp.ne.s32.totalorder %s88, %s89
    %p100 = scmp.eq.s32.totalorder %s14, 0
    %p101 = por %p99, %p100
    %p102 = scmp.ne.s32.totalorder %s88, %s89
    %p103 = scmp.eq.s32.totalorder %s15, 7
    %p104 = por %p102, %p103
    %p106 = scmp.ne.s32.totalorder %s89, %s105
    %p107 = scmp.eq.s32.totalorder %s15, 0
    %p108 = por %p106, %p107
    %s109 = ssub.s32 %s16, %s28
    %p110 = scmp.eq.s32.totalorder %s109, 0
    %s112 = sadd.s32 %s111, 1
    %s113 = scalar_select %p110, %s111, %s112
    %p116 = pneg %p110
    %p117 = scmp.eq.s32.totalorder %s9, 7
    %p118 = por %p116, %p117
    %p119 = scmp.ne.s32.totalorder %s111, %s114
    %p120 = scmp.eq.s32.totalorder %s9, 0
    %p121 = por %p119, %p120
    %p122 = scmp.ne.s32.totalorder %s111, %s114
    %p123 = scmp.eq.s32.totalorder %s14, 7
    %p124 = por %p122, %p123
    %p125 = scmp.ne.s32.totalorder %s114, %s115
    %p126 = scmp.eq.s32.totalorder %s14, 0
    %p127 = por %p125, %p126
    %p128 = scmp.ne.s32.totalorder %s114, %s115
    %p129 = scmp.eq.s32.totalorder %s15, 7
    %p130 = por %p128, %p129
    %p132 = scmp.ne.s32.totalorder %s115, %s131
    %p133 = scmp.eq.s32.totalorder %s15, 0
    %p134 = por %p132, %p133
    %p135 = scmp.le.s32.totalorder 1, %s9
    %p136 = scmp.lt.s32.totalorder %s9, 9
    %p137 = pnand %p135, %p136
    %p138 = pneg %p137
    // Predicated region
    $region9: #{encode_bs.1} parent=5 // pred_check
      _
    $region10: #{encode_bs.1} parent=5 // pred_check_branch
      %140 = sbr.rel (%p137) target = $region12
    $region11: #{encode_bs.1} parent=5 // pred_region
      %s141 = ssub.s32 %s9, 1
      // Predicated region
      $region13: #{encode_bs.1} parent=11 // pred_check
        %p142 = pneg %p47
      $region14: #{encode_bs.1} parent=11 // pred_check_branch
        %144 = sbr.rel (%p142) target = $region16
      $region15: #{encode_bs.1} parent=11 // pred_region
        %s145 = smul.u32 6, %s19
        %p146 = scmp.lt.s32.totalorder %s145, 5
        %s147 = scalar_select %p146, %s145, 5
        %s148 = smul.addr %s147, 8
        %s149 = scalar_lea.vmem %s0, %s148
        %s150 = smul.u32 6, %s19
      $region16: #{encode_bs.1} parent=11 // pred_fallthru
        _
    $region12: #{encode_bs.1} parent=5 // pred_fallthru
      _
    %p151 = scmp.lt.s32.totalorder %s9, 8
    // Predicated region
    $region17: #{encode_bs.1} parent=5 // pred_check
      %p152 = pneg %p151
    $region18: #{encode_bs.1} parent=5 // pred_check_branch
      %154 = sbr.rel (%p152) target = $region20
    $region19: #{encode_bs.1} parent=5 // pred_region
      // Predicated region
      $region21: #{encode_bs.1} parent=19 // pred_check
        %p155 = pneg %p69
      $region22: #{encode_bs.1} parent=19 // pred_check_branch
        %157 = sbr.rel (%p155) target = $region24
      $region23: #{encode_bs.1} parent=19 // pred_region
        %s158 = smul.u32 128, %s16
        %s159 = smul.u32 6, %s17
        %p160 = scmp.lt.s32.totalorder %s158, 1023
        %s161 = scalar_select %p160, %s158, 1023
        %p162 = scmp.lt.s32.totalorder %s159, 5
        %s163 = scalar_select %p162, %s159, 5
        %s164 = smul.addr %s161, 6
        %s165 = sadd.s32 %s163, %s164
        %s166 = smul.addr %s165, 8
        %s167 = scalar_lea.vmem %s1, %s166
        %s168 = smul.u32 128, %s16
        %s169 = smul.u32 6, %s17
      $region24: #{encode_bs.1} parent=19 // pred_fallthru
        _
      // Predicated region
      $region25: #{encode_bs.1} parent=19 // pred_check
        %p170 = pneg %p95
      $region26: #{encode_bs.1} parent=19 // pred_check_branch
        %172 = sbr.rel (%p170) target = $region28
      $region27: #{encode_bs.1} parent=19 // pred_region
        %s173 = smul.u32 8, %s16
        %p174 = scmp.lt.s32.totalorder %s173, 63
        %s175 = scalar_select %p174, %s173, 63
        %s176 = scalar_lea.vmem %s2, %s175
        %s177 = smul.u32 8, %s16
      $region28: #{encode_bs.1} parent=19 // pred_fallthru
        _
    $region20: #{encode_bs.1} parent=5 // pred_fallthru
      _
    %p178 = scmp.le.s32.totalorder 1, %s9
    %p179 = scmp.lt.s32.totalorder %s9, 9
    %p180 = pnand %p178, %p179
    %p181 = pneg %p180
    // Predicated region
    $region29: #{encode_bs.1} parent=5 // pred_check
      _
    $region30: #{encode_bs.1} parent=5 // pred_check_branch
      %183 = sbr.rel (%p180) target = $region32
    $region31: #{encode_bs.1} parent=5 // pred_region
      %s184 = ssub.s32 %s9, 1
      %s185 = smul.u32 6, %s19
      %p186 = scmp.lt.s32.totalorder %s185, 5
      %s187 = scalar_select %p186, %s185, 5
      %s188 = smul.addr %s187, 8
      %s189 = scalar_lea.vmem %s0, %s188
      %p190 = pneg %p47
      %p191 = pneg %p44
      %s192 = smul.u32 128, %s18
      %s193 = smul.u32 6, %s19
      %p194 = scmp.lt.s32.totalorder %s192, 1023
      %s195 = scalar_select %p194, %s192, 1023
      %p196 = scmp.lt.s32.totalorder %s193, 5
      %s197 = scalar_select %p196, %s193, 5
      %s198 = smul.addr %s195, 6
      %s199 = sadd.s32 %s197, %s198
      %s200 = smul.addr %s199, 8
      %s201 = scalar_lea.vmem %s1, %s200
      %p202 = pneg %p75
      %p203 = pneg %p72
      %s204 = smul.u32 8, %s18
      %p205 = scmp.lt.s32.totalorder %s204, 63
      %s206 = scalar_select %p205, %s204, 63
      %s207 = scalar_lea.vmem %s2, %s206
      %p208 = pneg %p101
      %p209 = pneg %p98
      %p210 = pneg %p127
      %p211 = pneg %p124
      %s212 = smul.u32 8, %s18
      %p213 = scmp.lt.s32.totalorder %s212, 63
      %s214 = scalar_select %p213, %s212, 63
      %s215 = smul.addr %s214, 8
      %s216 = scalar_lea.vmem %s3, %s215
      %s217 = smul.u32 6, %s19
      %p218 = scmp.lt.s32.totalorder %s217, 5
      %s219 = scalar_select %p218, %s217, 5
      %s220 = smul.addr %s219, 8
      %s221 = scalar_lea.vmem %s0, %s220
      %s222 = smul.u32 6, %s19
      %s223 = smul.u32 128, %s18
      %s224 = smul.u32 6, %s19
      %p225 = scmp.lt.s32.totalorder %s223, 1023
      %s226 = scalar_select %p225, %s223, 1023
      %p227 = scmp.lt.s32.totalorder %s224, 5
      %s228 = scalar_select %p227, %s224, 5
      %s229 = smul.addr %s226, 6
      %s230 = sadd.s32 %s228, %s229
      %s231 = smul.addr %s230, 8
      %s232 = scalar_lea.vmem %s1, %s231
      %s233 = smul.u32 128, %s18
      %s234 = smul.u32 6, %s19
      %s235 = smul.u32 8, %s18
      %p236 = scmp.lt.s32.totalorder %s235, 63
      %s237 = scalar_select %p236, %s235, 63
      %s238 = scalar_lea.vmem %s2, %s237
      %s239 = smul.u32 8, %s18
      %s240 = smul.u32 8, %s18
      %p241 = scmp.lt.s32.totalorder %s240, 63
      %s242 = scalar_select %p241, %s240, 63
      %s243 = smul.addr %s242, 8
      %s244 = scalar_lea.vmem %s3, %s243
      %s245 = smul.u32 8, %s18
      %p246 = scmp.eq.s32.totalorder %s19, 0
      // Predicated region
      $region33: #{encode_bs.1} parent=31 // pred_check
        %p247 = pneg %p246
      $region34: #{encode_bs.1} parent=31 // pred_check_branch
        %249 = sbr.rel (%p247) target = $region36
      $region35: #{encode_bs.1} parent=31 // pred_region
        %250 = vst [vmem:[#allocation2] sm:$0xff] 0.0
        %251 = vst [vmem:[#allocation2 + $0x8] sm:$0xff] 0.0
        %252 = vst [vmem:[#allocation2 + $0x10] sm:$0xff] 0.0
        %253 = vst [vmem:[#allocation2 + $0x18] sm:$0xff] 0.0
        %254 = vst [vmem:[#allocation2 + $0x20] sm:$0xff] 0.0
        %255 = vst [vmem:[#allocation2 + $0x28] sm:$0xff] 0.0
        %256 = vst [vmem:[#allocation2 + $0x30] sm:$0xff] 0.0
        %257 = vst [vmem:[#allocation2 + $0x38] sm:$0xff] 0.0
      $region36: #{encode_bs.1} parent=31 // pred_fallthru
        _
      %v258 = vld [vmem:[#allocation2] sm:$0xff]
      %v259 = vld [vmem:[#allocation2 + $0x8] sm:$0xff]
      %v260 = vld [vmem:[#allocation2 + $0x10] sm:$0xff]
      %v261 = vld [vmem:[#allocation2 + $0x18] sm:$0xff]
      %v262 = vld [vmem:[#allocation2 + $0x20] sm:$0xff]
      %v263 = vld [vmem:[#allocation2 + $0x28] sm:$0xff]
      %v264 = vld [vmem:[#allocation2 + $0x30] sm:$0xff]
      %v265 = vld [vmem:[#allocation2 + $0x38] sm:$0xff]
      %v266 = vld [vmem:[%s221] sm:$0xff]
      %v267 = vld [vmem:[%s221 + $0x8] sm:$0xff]
      %v268 = vld [vmem:[%s221 + $0x10] sm:$0xff]
      %v269 = vld [vmem:[%s221 + $0x18] sm:$0xff]
      %v270 = vld [vmem:[%s221 + $0x20] sm:$0xff]
      %v271 = vld [vmem:[%s221 + $0x28] sm:$0xff]
      %v272 = vld [vmem:[%s232] sm:$0xff]
      %v273 = vld [vmem:[%s232 + $0x8] sm:$0xff]
      %v274 = vld [vmem:[%s232 + $0x10] sm:$0xff]
      %v275 = vld [vmem:[%s232 + $0x18] sm:$0xff]
      %v276 = vld [vmem:[%s232 + $0x20] sm:$0xff]
      %v277 = vld [vmem:[%s232 + $0x28] sm:$0xff]
      %v278 = vld [vmem:[%s232 + $0x30] sm:$0xff]
      %v279 = vld [vmem:[%s232 + $0x38] sm:$0xff]
      %v280 = vld [vmem:[%s232 + $0x40] sm:$0xff]
      %v281 = vld [vmem:[%s232 + $0x48] sm:$0xff]
      %v282 = vld [vmem:[%s232 + $0x50] sm:$0xff]
      %v283 = vld [vmem:[%s232 + $0x58] sm:$0xff]
      %v284 = vld [vmem:[%s232 + $0x60] sm:$0xff]
      %v285 = vld [vmem:[%s232 + $0x68] sm:$0xff]
      %v286 = vld [vmem:[%s232 + $0x70] sm:$0xff]
      %v287 = vld [vmem:[%s232 + $0x78] sm:$0xff]
      %v288 = vld [vmem:[%s232 + $0x80] sm:$0xff]
      %v289 = vld [vmem:[%s232 + $0x88] sm:$0xff]
      %v290 = vld [vmem:[%s232 + $0x90] sm:$0xff]
      %v291 = vld [vmem:[%s232 + $0x98] sm:$0xff]
      %v292 = vld [vmem:[%s232 + $0xa0] sm:$0xff]
      %v293 = vld [vmem:[%s232 + $0xa8] sm:$0xff]
      %v294 = vld [vmem:[%s232 + $0xb0] sm:$0xff]
      %v295 = vld [vmem:[%s232 + $0xb8] sm:$0xff]
      %v296 = vld [vmem:[%s232 + $0xc0] sm:$0xff]
      %v297 = vld [vmem:[%s232 + $0xc8] sm:$0xff]
      %v298 = vld [vmem:[%s232 + $0xd0] sm:$0xff]
      %v299 = vld [vmem:[%s232 + $0xd8] sm:$0xff]
      %v300 = vld [vmem:[%s232 + $0xe0] sm:$0xff]
      %v301 = vld [vmem:[%s232 + $0xe8] sm:$0xff]
      %v302 = vld [vmem:[%s232 + $0xf0] sm:$0xff]
      %v303 = vld [vmem:[%s232 + $0xf8] sm:$0xff]
      %v304 = vld [vmem:[%s232 + $0x100] sm:$0xff]
      %v305 = vld [vmem:[%s232 + $0x108] sm:$0xff]
      %v306 = vld [vmem:[%s232 + $0x110] sm:$0xff]
      %v307 = vld [vmem:[%s232 + $0x118] sm:$0xff]
      %v308 = vld [vmem:[%s232 + $0x120] sm:$0xff]
      %v309 = vld [vmem:[%s232 + $0x128] sm:$0xff]
      %v310 = vld [vmem:[%s232 + $0x130] sm:$0xff]
      %v311 = vld [vmem:[%s232 + $0x138] sm:$0xff]
      %v312 = vld [vmem:[%s232 + $0x140] sm:$0xff]
      %v313 = vld [vmem:[%s232 + $0x148] sm:$0xff]
      %v314 = vld [vmem:[%s232 + $0x150] sm:$0xff]
      %v315 = vld [vmem:[%s232 + $0x158] sm:$0xff]
      %v316 = vld [vmem:[%s232 + $0x160] sm:$0xff]
      %v317 = vld [vmem:[%s232 + $0x168] sm:$0xff]
      %v318 = vld [vmem:[%s232 + $0x170] sm:$0xff]
      %v319 = vld [vmem:[%s232 + $0x178] sm:$0xff]
      %v320 = vld [vmem:[%s232 + $0x180] sm:$0xff]
      %v321 = vld [vmem:[%s232 + $0x188] sm:$0xff]
      %v322 = vld [vmem:[%s232 + $0x190] sm:$0xff]
      %v323 = vld [vmem:[%s232 + $0x198] sm:$0xff]
      %v324 = vld [vmem:[%s232 + $0x1a0] sm:$0xff]
      %v325 = vld [vmem:[%s232 + $0x1a8] sm:$0xff]
      %v326 = vld [vmem:[%s232 + $0x1b0] sm:$0xff]
      %v327 = vld [vmem:[%s232 + $0x1b8] sm:$0xff]
      %v328 = vld [vmem:[%s232 + $0x1c0] sm:$0xff]
      %v329 = vld [vmem:[%s232 + $0x1c8] sm:$0xff]
      %v330 = vld [vmem:[%s232 + $0x1d0] sm:$0xff]
      %v331 = vld [vmem:[%s232 + $0x1d8] sm:$0xff]
      %v332 = vld [vmem:[%s232 + $0x1e0] sm:$0xff]
      %v333 = vld [vmem:[%s232 + $0x1e8] sm:$0xff]
      %v334 = vld [vmem:[%s232 + $0x1f0] sm:$0xff]
      %v335 = vld [vmem:[%s232 + $0x1f8] sm:$0xff]
      %v336 = vld [vmem:[%s232 + $0x200] sm:$0xff]
      %v337 = vld [vmem:[%s232 + $0x208] sm:$0xff]
      %v338 = vld [vmem:[%s232 + $0x210] sm:$0xff]
      %v339 = vld [vmem:[%s232 + $0x218] sm:$0xff]
      %v340 = vld [vmem:[%s232 + $0x220] sm:$0xff]
      %v341 = vld [vmem:[%s232 + $0x228] sm:$0xff]
      %v342 = vld [vmem:[%s232 + $0x230] sm:$0xff]
      %v343 = vld [vmem:[%s232 + $0x238] sm:$0xff]
      %v344 = vld [vmem:[%s232 + $0x240] sm:$0xff]
      %v345 = vld [vmem:[%s232 + $0x248] sm:$0xff]
      %v346 = vld [vmem:[%s232 + $0x250] sm:$0xff]
      %v347 = vld [vmem:[%s232 + $0x258] sm:$0xff]
      %v348 = vld [vmem:[%s232 + $0x260] sm:$0xff]
      %v349 = vld [vmem:[%s232 + $0x268] sm:$0xff]
      %v350 = vld [vmem:[%s232 + $0x270] sm:$0xff]
      %v351 = vld [vmem:[%s232 + $0x278] sm:$0xff]
      %v352 = vld [vmem:[%s232 + $0x280] sm:$0xff]
      %v353 = vld [vmem:[%s232 + $0x288] sm:$0xff]
      %v354 = vld [vmem:[%s232 + $0x290] sm:$0xff]
      %v355 = vld [vmem:[%s232 + $0x298] sm:$0xff]
      %v356 = vld [vmem:[%s232 + $0x2a0] sm:$0xff]
      %v357 = vld [vmem:[%s232 + $0x2a8] sm:$0xff]
      %v358 = vld [vmem:[%s232 + $0x2b0] sm:$0xff]
      %v359 = vld [vmem:[%s232 + $0x2b8] sm:$0xff]
      %v360 = vld [vmem:[%s232 + $0x2c0] sm:$0xff]
      %v361 = vld [vmem:[%s232 + $0x2c8] sm:$0xff]
      %v362 = vld [vmem:[%s232 + $0x2d0] sm:$0xff]
      %v363 = vld [vmem:[%s232 + $0x2d8] sm:$0xff]
      %v364 = vld [vmem:[%s232 + $0x2e0] sm:$0xff]
      %v365 = vld [vmem:[%s232 + $0x2e8] sm:$0xff]
      %v366 = vld [vmem:[%s232 + $0x2f0] sm:$0xff]
      %v367 = vld [vmem:[%s232 + $0x2f8] sm:$0xff]
      %v368 = vld [vmem:[%s232 + $0x300] sm:$0xff]
      %v369 = vld [vmem:[%s232 + $0x308] sm:$0xff]
      %v370 = vld [vmem:[%s232 + $0x310] sm:$0xff]
      %v371 = vld [vmem:[%s232 + $0x318] sm:$0xff]
      %v372 = vld [vmem:[%s232 + $0x320] sm:$0xff]
      %v373 = vld [vmem:[%s232 + $0x328] sm:$0xff]
      %v374 = vld [vmem:[%s232 + $0x330] sm:$0xff]
      %v375 = vld [vmem:[%s232 + $0x338] sm:$0xff]
      %v376 = vld [vmem:[%s232 + $0x340] sm:$0xff]
      %v377 = vld [vmem:[%s232 + $0x348] sm:$0xff]
      %v378 = vld [vmem:[%s232 + $0x350] sm:$0xff]
      %v379 = vld [vmem:[%s232 + $0x358] sm:$0xff]
      %v380 = vld [vmem:[%s232 + $0x360] sm:$0xff]
      %v381 = vld [vmem:[%s232 + $0x368] sm:$0xff]
      %v382 = vld [vmem:[%s232 + $0x370] sm:$0xff]
      %v383 = vld [vmem:[%s232 + $0x378] sm:$0xff]
      %v384 = vld [vmem:[%s232 + $0x380] sm:$0xff]
      %v385 = vld [vmem:[%s232 + $0x388] sm:$0xff]
      %v386 = vld [vmem:[%s232 + $0x390] sm:$0xff]
      %v387 = vld [vmem:[%s232 + $0x398] sm:$0xff]
      %v388 = vld [vmem:[%s232 + $0x3a0] sm:$0xff]
      %v389 = vld [vmem:[%s232 + $0x3a8] sm:$0xff]
      %v390 = vld [vmem:[%s232 + $0x3b0] sm:$0xff]
      %v391 = vld [vmem:[%s232 + $0x3b8] sm:$0xff]
      %v392 = vld [vmem:[%s232 + $0x3c0] sm:$0xff]
      %v393 = vld [vmem:[%s232 + $0x3c8] sm:$0xff]
      %v394 = vld [vmem:[%s232 + $0x3d0] sm:$0xff]
      %v395 = vld [vmem:[%s232 + $0x3d8] sm:$0xff]
      %v396 = vld [vmem:[%s232 + $0x3e0] sm:$0xff]
      %v397 = vld [vmem:[%s232 + $0x3e8] sm:$0xff]
      %v398 = vld [vmem:[%s232 + $0x3f0] sm:$0xff]
      %v399 = vld [vmem:[%s232 + $0x3f8] sm:$0xff]
      %v400 = vld [vmem:[%s232 + $0x400] sm:$0xff]
      %v401 = vld [vmem:[%s232 + $0x408] sm:$0xff]
      %v402 = vld [vmem:[%s232 + $0x410] sm:$0xff]
      %v403 = vld [vmem:[%s232 + $0x418] sm:$0xff]
      %v404 = vld [vmem:[%s232 + $0x420] sm:$0xff]
      %v405 = vld [vmem:[%s232 + $0x428] sm:$0xff]
      %v406 = vld [vmem:[%s232 + $0x430] sm:$0xff]
      %v407 = vld [vmem:[%s232 + $0x438] sm:$0xff]
      %v408 = vld [vmem:[%s232 + $0x440] sm:$0xff]
      %v409 = vld [vmem:[%s232 + $0x448] sm:$0xff]
      %v410 = vld [vmem:[%s232 + $0x450] sm:$0xff]
      %v411 = vld [vmem:[%s232 + $0x458] sm:$0xff]
      %v412 = vld [vmem:[%s232 + $0x460] sm:$0xff]
      %v413 = vld [vmem:[%s232 + $0x468] sm:$0xff]
      %v414 = vld [vmem:[%s232 + $0x470] sm:$0xff]
      %v415 = vld [vmem:[%s232 + $0x478] sm:$0xff]
      %v416 = vld [vmem:[%s232 + $0x480] sm:$0xff]
      %v417 = vld [vmem:[%s232 + $0x488] sm:$0xff]
      %v418 = vld [vmem:[%s232 + $0x490] sm:$0xff]
      %v419 = vld [vmem:[%s232 + $0x498] sm:$0xff]
      %v420 = vld [vmem:[%s232 + $0x4a0] sm:$0xff]
      %v421 = vld [vmem:[%s232 + $0x4a8] sm:$0xff]
      %v422 = vld [vmem:[%s232 + $0x4b0] sm:$0xff]
      %v423 = vld [vmem:[%s232 + $0x4b8] sm:$0xff]
      %v424 = vld [vmem:[%s232 + $0x4c0] sm:$0xff]
      %v425 = vld [vmem:[%s232 + $0x4c8] sm:$0xff]
      %v426 = vld [vmem:[%s232 + $0x4d0] sm:$0xff]
      %v427 = vld [vmem:[%s232 + $0x4d8] sm:$0xff]
      %v428 = vld [vmem:[%s232 + $0x4e0] sm:$0xff]
      %v429 = vld [vmem:[%s232 + $0x4e8] sm:$0xff]
      %v430 = vld [vmem:[%s232 + $0x4f0] sm:$0xff]
      %v431 = vld [vmem:[%s232 + $0x4f8] sm:$0xff]
      %v432 = vld [vmem:[%s232 + $0x500] sm:$0xff]
      %v433 = vld [vmem:[%s232 + $0x508] sm:$0xff]
      %v434 = vld [vmem:[%s232 + $0x510] sm:$0xff]
      %v435 = vld [vmem:[%s232 + $0x518] sm:$0xff]
      %v436 = vld [vmem:[%s232 + $0x520] sm:$0xff]
      %v437 = vld [vmem:[%s232 + $0x528] sm:$0xff]
      %v438 = vld [vmem:[%s232 + $0x530] sm:$0xff]
      %v439 = vld [vmem:[%s232 + $0x538] sm:$0xff]
      %v440 = vld [vmem:[%s232 + $0x540] sm:$0xff]
      %v441 = vld [vmem:[%s232 + $0x548] sm:$0xff]
      %v442 = vld [vmem:[%s232 + $0x550] sm:$0xff]
      %v443 = vld [vmem:[%s232 + $0x558] sm:$0xff]
      %v444 = vld [vmem:[%s232 + $0x560] sm:$0xff]
      %v445 = vld [vmem:[%s232 + $0x568] sm:$0xff]
      %v446 = vld [vmem:[%s232 + $0x570] sm:$0xff]
      %v447 = vld [vmem:[%s232 + $0x578] sm:$0xff]
      %v448 = vld [vmem:[%s232 + $0x580] sm:$0xff]
      %v449 = vld [vmem:[%s232 + $0x588] sm:$0xff]
      %v450 = vld [vmem:[%s232 + $0x590] sm:$0xff]
      %v451 = vld [vmem:[%s232 + $0x598] sm:$0xff]
      %v452 = vld [vmem:[%s232 + $0x5a0] sm:$0xff]
      %v453 = vld [vmem:[%s232 + $0x5a8] sm:$0xff]
      %v454 = vld [vmem:[%s232 + $0x5b0] sm:$0xff]
      %v455 = vld [vmem:[%s232 + $0x5b8] sm:$0xff]
      %v456 = vld [vmem:[%s232 + $0x5c0] sm:$0xff]
      %v457 = vld [vmem:[%s232 + $0x5c8] sm:$0xff]
      %v458 = vld [vmem:[%s232 + $0x5d0] sm:$0xff]
      %v459 = vld [vmem:[%s232 + $0x5d8] sm:$0xff]
      %v460 = vld [vmem:[%s232 + $0x5e0] sm:$0xff]
      %v461 = vld [vmem:[%s232 + $0x5e8] sm:$0xff]
      %v462 = vld [vmem:[%s232 + $0x5f0] sm:$0xff]
      %v463 = vld [vmem:[%s232 + $0x5f8] sm:$0xff]
      %v464 = vld [vmem:[%s232 + $0x600] sm:$0xff]
      %v465 = vld [vmem:[%s232 + $0x608] sm:$0xff]
      %v466 = vld [vmem:[%s232 + $0x610] sm:$0xff]
      %v467 = vld [vmem:[%s232 + $0x618] sm:$0xff]
      %v468 = vld [vmem:[%s232 + $0x620] sm:$0xff]
      %v469 = vld [vmem:[%s232 + $0x628] sm:$0xff]
      %v470 = vld [vmem:[%s232 + $0x630] sm:$0xff]
      %v471 = vld [vmem:[%s232 + $0x638] sm:$0xff]
      %v472 = vld [vmem:[%s232 + $0x640] sm:$0xff]
      %v473 = vld [vmem:[%s232 + $0x648] sm:$0xff]
      %v474 = vld [vmem:[%s232 + $0x650] sm:$0xff]
      %v475 = vld [vmem:[%s232 + $0x658] sm:$0xff]
      %v476 = vld [vmem:[%s232 + $0x660] sm:$0xff]
      %v477 = vld [vmem:[%s232 + $0x668] sm:$0xff]
      %v478 = vld [vmem:[%s232 + $0x670] sm:$0xff]
      %v479 = vld [vmem:[%s232 + $0x678] sm:$0xff]
      %v480 = vld [vmem:[%s232 + $0x680] sm:$0xff]
      %v481 = vld [vmem:[%s232 + $0x688] sm:$0xff]
      %v482 = vld [vmem:[%s232 + $0x690] sm:$0xff]
      %v483 = vld [vmem:[%s232 + $0x698] sm:$0xff]
      %v484 = vld [vmem:[%s232 + $0x6a0] sm:$0xff]
      %v485 = vld [vmem:[%s232 + $0x6a8] sm:$0xff]
      %v486 = vld [vmem:[%s232 + $0x6b0] sm:$0xff]
      %v487 = vld [vmem:[%s232 + $0x6b8] sm:$0xff]
      %v488 = vld [vmem:[%s232 + $0x6c0] sm:$0xff]
      %v489 = vld [vmem:[%s232 + $0x6c8] sm:$0xff]
      %v490 = vld [vmem:[%s232 + $0x6d0] sm:$0xff]
      %v491 = vld [vmem:[%s232 + $0x6d8] sm:$0xff]
      %v492 = vld [vmem:[%s232 + $0x6e0] sm:$0xff]
      %v493 = vld [vmem:[%s232 + $0x6e8] sm:$0xff]
      %v494 = vld [vmem:[%s232 + $0x6f0] sm:$0xff]
      %v495 = vld [vmem:[%s232 + $0x6f8] sm:$0xff]
      %v496 = vld [vmem:[%s232 + $0x700] sm:$0xff]
      %v497 = vld [vmem:[%s232 + $0x708] sm:$0xff]
      %v498 = vld [vmem:[%s232 + $0x710] sm:$0xff]
      %v499 = vld [vmem:[%s232 + $0x718] sm:$0xff]
      %v500 = vld [vmem:[%s232 + $0x720] sm:$0xff]
      %v501 = vld [vmem:[%s232 + $0x728] sm:$0xff]
      %v502 = vld [vmem:[%s232 + $0x730] sm:$0xff]
      %v503 = vld [vmem:[%s232 + $0x738] sm:$0xff]
      %v504 = vld [vmem:[%s232 + $0x740] sm:$0xff]
      %v505 = vld [vmem:[%s232 + $0x748] sm:$0xff]
      %v506 = vld [vmem:[%s232 + $0x750] sm:$0xff]
      %v507 = vld [vmem:[%s232 + $0x758] sm:$0xff]
      %v508 = vld [vmem:[%s232 + $0x760] sm:$0xff]
      %v509 = vld [vmem:[%s232 + $0x768] sm:$0xff]
      %v510 = vld [vmem:[%s232 + $0x770] sm:$0xff]
      %v511 = vld [vmem:[%s232 + $0x778] sm:$0xff]
      %v512 = vld [vmem:[%s232 + $0x780] sm:$0xff]
      %v513 = vld [vmem:[%s232 + $0x788] sm:$0xff]
      %v514 = vld [vmem:[%s232 + $0x790] sm:$0xff]
      %v515 = vld [vmem:[%s232 + $0x798] sm:$0xff]
      %v516 = vld [vmem:[%s232 + $0x7a0] sm:$0xff]
      %v517 = vld [vmem:[%s232 + $0x7a8] sm:$0xff]
      %v518 = vld [vmem:[%s232 + $0x7b0] sm:$0xff]
      %v519 = vld [vmem:[%s232 + $0x7b8] sm:$0xff]
      %v520 = vld [vmem:[%s232 + $0x7c0] sm:$0xff]
      %v521 = vld [vmem:[%s232 + $0x7c8] sm:$0xff]
      %v522 = vld [vmem:[%s232 + $0x7d0] sm:$0xff]
      %v523 = vld [vmem:[%s232 + $0x7d8] sm:$0xff]
      %v524 = vld [vmem:[%s232 + $0x7e0] sm:$0xff]
      %v525 = vld [vmem:[%s232 + $0x7e8] sm:$0xff]
      %v526 = vld [vmem:[%s232 + $0x7f0] sm:$0xff]
      %v527 = vld [vmem:[%s232 + $0x7f8] sm:$0xff]
      %v528 = vld [vmem:[%s232 + $0x800] sm:$0xff]
      %v529 = vld [vmem:[%s232 + $0x808] sm:$0xff]
      %v530 = vld [vmem:[%s232 + $0x810] sm:$0xff]
      %v531 = vld [vmem:[%s232 + $0x818] sm:$0xff]
      %v532 = vld [vmem:[%s232 + $0x820] sm:$0xff]
      %v533 = vld [vmem:[%s232 + $0x828] sm:$0xff]
      %v534 = vld [vmem:[%s232 + $0x830] sm:$0xff]
      %v535 = vld [vmem:[%s232 + $0x838] sm:$0xff]
      %v536 = vld [vmem:[%s232 + $0x840] sm:$0xff]
      %v537 = vld [vmem:[%s232 + $0x848] sm:$0xff]
      %v538 = vld [vmem:[%s232 + $0x850] sm:$0xff]
      %v539 = vld [vmem:[%s232 + $0x858] sm:$0xff]
      %v540 = vld [vmem:[%s232 + $0x860] sm:$0xff]
      %v541 = vld [vmem:[%s232 + $0x868] sm:$0xff]
      %v542 = vld [vmem:[%s232 + $0x870] sm:$0xff]
      %v543 = vld [vmem:[%s232 + $0x878] sm:$0xff]
      %v544 = vld [vmem:[%s232 + $0x880] sm:$0xff]
      %v545 = vld [vmem:[%s232 + $0x888] sm:$0xff]
      %v546 = vld [vmem:[%s232 + $0x890] sm:$0xff]
      %v547 = vld [vmem:[%s232 + $0x898] sm:$0xff]
      %v548 = vld [vmem:[%s232 + $0x8a0] sm:$0xff]
      %v549 = vld [vmem:[%s232 + $0x8a8] sm:$0xff]
      %v550 = vld [vmem:[%s232 + $0x8b0] sm:$0xff]
      %v551 = vld [vmem:[%s232 + $0x8b8] sm:$0xff]
      %v552 = vld [vmem:[%s232 + $0x8c0] sm:$0xff]
      %v553 = vld [vmem:[%s232 + $0x8c8] sm:$0xff]
      %v554 = vld [vmem:[%s232 + $0x8d0] sm:$0xff]
      %v555 = vld [vmem:[%s232 + $0x8d8] sm:$0xff]
      %v556 = vld [vmem:[%s232 + $0x8e0] sm:$0xff]
      %v557 = vld [vmem:[%s232 + $0x8e8] sm:$0xff]
      %v558 = vld [vmem:[%s232 + $0x8f0] sm:$0xff]
      %v559 = vld [vmem:[%s232 + $0x8f8] sm:$0xff]
      %v560 = vld [vmem:[%s232 + $0x900] sm:$0xff]
      %v561 = vld [vmem:[%s232 + $0x908] sm:$0xff]
      %v562 = vld [vmem:[%s232 + $0x910] sm:$0xff]
      %v563 = vld [vmem:[%s232 + $0x918] sm:$0xff]
      %v564 = vld [vmem:[%s232 + $0x920] sm:$0xff]
      %v565 = vld [vmem:[%s232 + $0x928] sm:$0xff]
      %v566 = vld [vmem:[%s232 + $0x930] sm:$0xff]
      %v567 = vld [vmem:[%s232 + $0x938] sm:$0xff]
      %v568 = vld [vmem:[%s232 + $0x940] sm:$0xff]
      %v569 = vld [vmem:[%s232 + $0x948] sm:$0xff]
      %v570 = vld [vmem:[%s232 + $0x950] sm:$0xff]
      %v571 = vld [vmem:[%s232 + $0x958] sm:$0xff]
      %v572 = vld [vmem:[%s232 + $0x960] sm:$0xff]
      %v573 = vld [vmem:[%s232 + $0x968] sm:$0xff]
      %v574 = vld [vmem:[%s232 + $0x970] sm:$0xff]
      %v575 = vld [vmem:[%s232 + $0x978] sm:$0xff]
      %v576 = vld [vmem:[%s232 + $0x980] sm:$0xff]
      %v577 = vld [vmem:[%s232 + $0x988] sm:$0xff]
      %v578 = vld [vmem:[%s232 + $0x990] sm:$0xff]
      %v579 = vld [vmem:[%s232 + $0x998] sm:$0xff]
      %v580 = vld [vmem:[%s232 + $0x9a0] sm:$0xff]
      %v581 = vld [vmem:[%s232 + $0x9a8] sm:$0xff]
      %v582 = vld [vmem:[%s232 + $0x9b0] sm:$0xff]
      %v583 = vld [vmem:[%s232 + $0x9b8] sm:$0xff]
      %v584 = vld [vmem:[%s232 + $0x9c0] sm:$0xff]
      %v585 = vld [vmem:[%s232 + $0x9c8] sm:$0xff]
      %v586 = vld [vmem:[%s232 + $0x9d0] sm:$0xff]
      %v587 = vld [vmem:[%s232 + $0x9d8] sm:$0xff]
      %v588 = vld [vmem:[%s232 + $0x9e0] sm:$0xff]
      %v589 = vld [vmem:[%s232 + $0x9e8] sm:$0xff]
      %v590 = vld [vmem:[%s232 + $0x9f0] sm:$0xff]
      %v591 = vld [vmem:[%s232 + $0x9f8] sm:$0xff]
      %v592 = vld [vmem:[%s232 + $0xa00] sm:$0xff]
      %v593 = vld [vmem:[%s232 + $0xa08] sm:$0xff]
      %v594 = vld [vmem:[%s232 + $0xa10] sm:$0xff]
      %v595 = vld [vmem:[%s232 + $0xa18] sm:$0xff]
      %v596 = vld [vmem:[%s232 + $0xa20] sm:$0xff]
      %v597 = vld [vmem:[%s232 + $0xa28] sm:$0xff]
      %v598 = vld [vmem:[%s232 + $0xa30] sm:$0xff]
      %v599 = vld [vmem:[%s232 + $0xa38] sm:$0xff]
      %v600 = vld [vmem:[%s232 + $0xa40] sm:$0xff]
      %v601 = vld [vmem:[%s232 + $0xa48] sm:$0xff]
      %v602 = vld [vmem:[%s232 + $0xa50] sm:$0xff]
      %v603 = vld [vmem:[%s232 + $0xa58] sm:$0xff]
      %v604 = vld [vmem:[%s232 + $0xa60] sm:$0xff]
      %v605 = vld [vmem:[%s232 + $0xa68] sm:$0xff]
      %v606 = vld [vmem:[%s232 + $0xa70] sm:$0xff]
      %v607 = vld [vmem:[%s232 + $0xa78] sm:$0xff]
      %v608 = vld [vmem:[%s232 + $0xa80] sm:$0xff]
      %v609 = vld [vmem:[%s232 + $0xa88] sm:$0xff]
      %v610 = vld [vmem:[%s232 + $0xa90] sm:$0xff]
      %v611 = vld [vmem:[%s232 + $0xa98] sm:$0xff]
      %v612 = vld [vmem:[%s232 + $0xaa0] sm:$0xff]
      %v613 = vld [vmem:[%s232 + $0xaa8] sm:$0xff]
      %v614 = vld [vmem:[%s232 + $0xab0] sm:$0xff]
      %v615 = vld [vmem:[%s232 + $0xab8] sm:$0xff]
      %v616 = vld [vmem:[%s232 + $0xac0] sm:$0xff]
      %v617 = vld [vmem:[%s232 + $0xac8] sm:$0xff]
      %v618 = vld [vmem:[%s232 + $0xad0] sm:$0xff]
      %v619 = vld [vmem:[%s232 + $0xad8] sm:$0xff]
      %v620 = vld [vmem:[%s232 + $0xae0] sm:$0xff]
      %v621 = vld [vmem:[%s232 + $0xae8] sm:$0xff]
      %v622 = vld [vmem:[%s232 + $0xaf0] sm:$0xff]
      %v623 = vld [vmem:[%s232 + $0xaf8] sm:$0xff]
      %v624 = vld [vmem:[%s232 + $0xb00] sm:$0xff]
      %v625 = vld [vmem:[%s232 + $0xb08] sm:$0xff]
      %v626 = vld [vmem:[%s232 + $0xb10] sm:$0xff]
      %v627 = vld [vmem:[%s232 + $0xb18] sm:$0xff]
      %v628 = vld [vmem:[%s232 + $0xb20] sm:$0xff]
      %v629 = vld [vmem:[%s232 + $0xb28] sm:$0xff]
      %v630 = vld [vmem:[%s232 + $0xb30] sm:$0xff]
      %v631 = vld [vmem:[%s232 + $0xb38] sm:$0xff]
      %v632 = vld [vmem:[%s232 + $0xb40] sm:$0xff]
      %v633 = vld [vmem:[%s232 + $0xb48] sm:$0xff]
      %v634 = vld [vmem:[%s232 + $0xb50] sm:$0xff]
      %v635 = vld [vmem:[%s232 + $0xb58] sm:$0xff]
      %v636 = vld [vmem:[%s232 + $0xb60] sm:$0xff]
      %v637 = vld [vmem:[%s232 + $0xb68] sm:$0xff]
      %v638 = vld [vmem:[%s232 + $0xb70] sm:$0xff]
      %v639 = vld [vmem:[%s232 + $0xb78] sm:$0xff]
      %v640 = vld [vmem:[%s232 + $0xb80] sm:$0xff]
      %v641 = vld [vmem:[%s232 + $0xb88] sm:$0xff]
      %v642 = vld [vmem:[%s232 + $0xb90] sm:$0xff]
      %v643 = vld [vmem:[%s232 + $0xb98] sm:$0xff]
      %v644 = vld [vmem:[%s232 + $0xba0] sm:$0xff]
      %v645 = vld [vmem:[%s232 + $0xba8] sm:$0xff]
      %v646 = vld [vmem:[%s232 + $0xbb0] sm:$0xff]
      %v647 = vld [vmem:[%s232 + $0xbb8] sm:$0xff]
      %v648 = vld [vmem:[%s232 + $0xbc0] sm:$0xff]
      %v649 = vld [vmem:[%s232 + $0xbc8] sm:$0xff]
      %v650 = vld [vmem:[%s232 + $0xbd0] sm:$0xff]
      %v651 = vld [vmem:[%s232 + $0xbd8] sm:$0xff]
      %v652 = vld [vmem:[%s232 + $0xbe0] sm:$0xff]
      %v653 = vld [vmem:[%s232 + $0xbe8] sm:$0xff]
      %v654 = vld [vmem:[%s232 + $0xbf0] sm:$0xff]
      %v655 = vld [vmem:[%s232 + $0xbf8] sm:$0xff]
      %v656 = vld [vmem:[%s232 + $0xc00] sm:$0xff]
      %v657 = vld [vmem:[%s232 + $0xc08] sm:$0xff]
      %v658 = vld [vmem:[%s232 + $0xc10] sm:$0xff]
      %v659 = vld [vmem:[%s232 + $0xc18] sm:$0xff]
      %v660 = vld [vmem:[%s232 + $0xc20] sm:$0xff]
      %v661 = vld [vmem:[%s232 + $0xc28] sm:$0xff]
      %v662 = vld [vmem:[%s232 + $0xc30] sm:$0xff]
      %v663 = vld [vmem:[%s232 + $0xc38] sm:$0xff]
      %v664 = vld [vmem:[%s232 + $0xc40] sm:$0xff]
      %v665 = vld [vmem:[%s232 + $0xc48] sm:$0xff]
      %v666 = vld [vmem:[%s232 + $0xc50] sm:$0xff]
      %v667 = vld [vmem:[%s232 + $0xc58] sm:$0xff]
      %v668 = vld [vmem:[%s232 + $0xc60] sm:$0xff]
      %v669 = vld [vmem:[%s232 + $0xc68] sm:$0xff]
      %v670 = vld [vmem:[%s232 + $0xc70] sm:$0xff]
      %v671 = vld [vmem:[%s232 + $0xc78] sm:$0xff]
      %v672 = vld [vmem:[%s232 + $0xc80] sm:$0xff]
      %v673 = vld [vmem:[%s232 + $0xc88] sm:$0xff]
      %v674 = vld [vmem:[%s232 + $0xc90] sm:$0xff]
      %v675 = vld [vmem:[%s232 + $0xc98] sm:$0xff]
      %v676 = vld [vmem:[%s232 + $0xca0] sm:$0xff]
      %v677 = vld [vmem:[%s232 + $0xca8] sm:$0xff]
      %v678 = vld [vmem:[%s232 + $0xcb0] sm:$0xff]
      %v679 = vld [vmem:[%s232 + $0xcb8] sm:$0xff]
      %v680 = vld [vmem:[%s232 + $0xcc0] sm:$0xff]
      %v681 = vld [vmem:[%s232 + $0xcc8] sm:$0xff]
      %v682 = vld [vmem:[%s232 + $0xcd0] sm:$0xff]
      %v683 = vld [vmem:[%s232 + $0xcd8] sm:$0xff]
      %v684 = vld [vmem:[%s232 + $0xce0] sm:$0xff]
      %v685 = vld [vmem:[%s232 + $0xce8] sm:$0xff]
      %v686 = vld [vmem:[%s232 + $0xcf0] sm:$0xff]
      %v687 = vld [vmem:[%s232 + $0xcf8] sm:$0xff]
      %v688 = vld [vmem:[%s232 + $0xd00] sm:$0xff]
      %v689 = vld [vmem:[%s232 + $0xd08] sm:$0xff]
      %v690 = vld [vmem:[%s232 + $0xd10] sm:$0xff]
      %v691 = vld [vmem:[%s232 + $0xd18] sm:$0xff]
      %v692 = vld [vmem:[%s232 + $0xd20] sm:$0xff]
      %v693 = vld [vmem:[%s232 + $0xd28] sm:$0xff]
      %v694 = vld [vmem:[%s232 + $0xd30] sm:$0xff]
      %v695 = vld [vmem:[%s232 + $0xd38] sm:$0xff]
      %v696 = vld [vmem:[%s232 + $0xd40] sm:$0xff]
      %v697 = vld [vmem:[%s232 + $0xd48] sm:$0xff]
      %v698 = vld [vmem:[%s232 + $0xd50] sm:$0xff]
      %v699 = vld [vmem:[%s232 + $0xd58] sm:$0xff]
      %v700 = vld [vmem:[%s232 + $0xd60] sm:$0xff]
      %v701 = vld [vmem:[%s232 + $0xd68] sm:$0xff]
      %v702 = vld [vmem:[%s232 + $0xd70] sm:$0xff]
      %v703 = vld [vmem:[%s232 + $0xd78] sm:$0xff]
      %v704 = vld [vmem:[%s232 + $0xd80] sm:$0xff]
      %v705 = vld [vmem:[%s232 + $0xd88] sm:$0xff]
      %v706 = vld [vmem:[%s232 + $0xd90] sm:$0xff]
      %v707 = vld [vmem:[%s232 + $0xd98] sm:$0xff]
      %v708 = vld [vmem:[%s232 + $0xda0] sm:$0xff]
      %v709 = vld [vmem:[%s232 + $0xda8] sm:$0xff]
      %v710 = vld [vmem:[%s232 + $0xdb0] sm:$0xff]
      %v711 = vld [vmem:[%s232 + $0xdb8] sm:$0xff]
      %v712 = vld [vmem:[%s232 + $0xdc0] sm:$0xff]
      %v713 = vld [vmem:[%s232 + $0xdc8] sm:$0xff]
      %v714 = vld [vmem:[%s232 + $0xdd0] sm:$0xff]
      %v715 = vld [vmem:[%s232 + $0xdd8] sm:$0xff]
      %v716 = vld [vmem:[%s232 + $0xde0] sm:$0xff]
      %v717 = vld [vmem:[%s232 + $0xde8] sm:$0xff]
      %v718 = vld [vmem:[%s232 + $0xdf0] sm:$0xff]
      %v719 = vld [vmem:[%s232 + $0xdf8] sm:$0xff]
      %v720 = vld [vmem:[%s232 + $0xe00] sm:$0xff]
      %v721 = vld [vmem:[%s232 + $0xe08] sm:$0xff]
      %v722 = vld [vmem:[%s232 + $0xe10] sm:$0xff]
      %v723 = vld [vmem:[%s232 + $0xe18] sm:$0xff]
      %v724 = vld [vmem:[%s232 + $0xe20] sm:$0xff]
      %v725 = vld [vmem:[%s232 + $0xe28] sm:$0xff]
      %v726 = vld [vmem:[%s232 + $0xe30] sm:$0xff]
      %v727 = vld [vmem:[%s232 + $0xe38] sm:$0xff]
      %v728 = vld [vmem:[%s232 + $0xe40] sm:$0xff]
      %v729 = vld [vmem:[%s232 + $0xe48] sm:$0xff]
      %v730 = vld [vmem:[%s232 + $0xe50] sm:$0xff]
      %v731 = vld [vmem:[%s232 + $0xe58] sm:$0xff]
      %v732 = vld [vmem:[%s232 + $0xe60] sm:$0xff]
      %v733 = vld [vmem:[%s232 + $0xe68] sm:$0xff]
      %v734 = vld [vmem:[%s232 + $0xe70] sm:$0xff]
      %v735 = vld [vmem:[%s232 + $0xe78] sm:$0xff]
      %v736 = vld [vmem:[%s232 + $0xe80] sm:$0xff]
      %v737 = vld [vmem:[%s232 + $0xe88] sm:$0xff]
      %v738 = vld [vmem:[%s232 + $0xe90] sm:$0xff]
      %v739 = vld [vmem:[%s232 + $0xe98] sm:$0xff]
      %v740 = vld [vmem:[%s232 + $0xea0] sm:$0xff]
      %v741 = vld [vmem:[%s232 + $0xea8] sm:$0xff]
      %v742 = vld [vmem:[%s232 + $0xeb0] sm:$0xff]
      %v743 = vld [vmem:[%s232 + $0xeb8] sm:$0xff]
      %v744 = vld [vmem:[%s232 + $0xec0] sm:$0xff]
      %v745 = vld [vmem:[%s232 + $0xec8] sm:$0xff]
      %v746 = vld [vmem:[%s232 + $0xed0] sm:$0xff]
      %v747 = vld [vmem:[%s232 + $0xed8] sm:$0xff]
      %v748 = vld [vmem:[%s232 + $0xee0] sm:$0xff]
      %v749 = vld [vmem:[%s232 + $0xee8] sm:$0xff]
      %v750 = vld [vmem:[%s232 + $0xef0] sm:$0xff]
      %v751 = vld [vmem:[%s232 + $0xef8] sm:$0xff]
      %v752 = vld [vmem:[%s232 + $0xf00] sm:$0xff]
      %v753 = vld [vmem:[%s232 + $0xf08] sm:$0xff]
      %v754 = vld [vmem:[%s232 + $0xf10] sm:$0xff]
      %v755 = vld [vmem:[%s232 + $0xf18] sm:$0xff]
      %v756 = vld [vmem:[%s232 + $0xf20] sm:$0xff]
      %v757 = vld [vmem:[%s232 + $0xf28] sm:$0xff]
      %v758 = vld [vmem:[%s232 + $0xf30] sm:$0xff]
      %v759 = vld [vmem:[%s232 + $0xf38] sm:$0xff]
      %v760 = vld [vmem:[%s232 + $0xf40] sm:$0xff]
      %v761 = vld [vmem:[%s232 + $0xf48] sm:$0xff]
      %v762 = vld [vmem:[%s232 + $0xf50] sm:$0xff]
      %v763 = vld [vmem:[%s232 + $0xf58] sm:$0xff]
      %v764 = vld [vmem:[%s232 + $0xf60] sm:$0xff]
      %v765 = vld [vmem:[%s232 + $0xf68] sm:$0xff]
      %v766 = vld [vmem:[%s232 + $0xf70] sm:$0xff]
      %v767 = vld [vmem:[%s232 + $0xf78] sm:$0xff]
      %v768 = vld [vmem:[%s232 + $0xf80] sm:$0xff]
      %v769 = vld [vmem:[%s232 + $0xf88] sm:$0xff]
      %v770 = vld [vmem:[%s232 + $0xf90] sm:$0xff]
      %v771 = vld [vmem:[%s232 + $0xf98] sm:$0xff]
      %v772 = vld [vmem:[%s232 + $0xfa0] sm:$0xff]
      %v773 = vld [vmem:[%s232 + $0xfa8] sm:$0xff]
      %v774 = vld [vmem:[%s232 + $0xfb0] sm:$0xff]
      %v775 = vld [vmem:[%s232 + $0xfb8] sm:$0xff]
      %v776 = vld [vmem:[%s232 + $0xfc0] sm:$0xff]
      %v777 = vld [vmem:[%s232 + $0xfc8] sm:$0xff]
      %v778 = vld [vmem:[%s232 + $0xfd0] sm:$0xff]
      %v779 = vld [vmem:[%s232 + $0xfd8] sm:$0xff]
      %v780 = vld [vmem:[%s232 + $0xfe0] sm:$0xff]
      %v781 = vld [vmem:[%s232 + $0xfe8] sm:$0xff]
      %v782 = vld [vmem:[%s232 + $0xff0] sm:$0xff]
      %v783 = vld [vmem:[%s232 + $0xff8] sm:$0xff]
      %v784 = vld [vmem:[%s232 + $0x1000] sm:$0xff]
      %v785 = vld [vmem:[%s232 + $0x1008] sm:$0xff]
      %v786 = vld [vmem:[%s232 + $0x1010] sm:$0xff]
      %v787 = vld [vmem:[%s232 + $0x1018] sm:$0xff]
      %v788 = vld [vmem:[%s232 + $0x1020] sm:$0xff]
      %v789 = vld [vmem:[%s232 + $0x1028] sm:$0xff]
      %v790 = vld [vmem:[%s232 + $0x1030] sm:$0xff]
      %v791 = vld [vmem:[%s232 + $0x1038] sm:$0xff]
      %v792 = vld [vmem:[%s232 + $0x1040] sm:$0xff]
      %v793 = vld [vmem:[%s232 + $0x1048] sm:$0xff]
      %v794 = vld [vmem:[%s232 + $0x1050] sm:$0xff]
      %v795 = vld [vmem:[%s232 + $0x1058] sm:$0xff]
      %v796 = vld [vmem:[%s232 + $0x1060] sm:$0xff]
      %v797 = vld [vmem:[%s232 + $0x1068] sm:$0xff]
      %v798 = vld [vmem:[%s232 + $0x1070] sm:$0xff]
      %v799 = vld [vmem:[%s232 + $0x1078] sm:$0xff]
      %v800 = vld [vmem:[%s232 + $0x1080] sm:$0xff]
      %v801 = vld [vmem:[%s232 + $0x1088] sm:$0xff]
      %v802 = vld [vmem:[%s232 + $0x1090] sm:$0xff]
      %v803 = vld [vmem:[%s232 + $0x1098] sm:$0xff]
      %v804 = vld [vmem:[%s232 + $0x10a0] sm:$0xff]
      %v805 = vld [vmem:[%s232 + $0x10a8] sm:$0xff]
      %v806 = vld [vmem:[%s232 + $0x10b0] sm:$0xff]
      %v807 = vld [vmem:[%s232 + $0x10b8] sm:$0xff]
      %v808 = vld [vmem:[%s232 + $0x10c0] sm:$0xff]
      %v809 = vld [vmem:[%s232 + $0x10c8] sm:$0xff]
      %v810 = vld [vmem:[%s232 + $0x10d0] sm:$0xff]
      %v811 = vld [vmem:[%s232 + $0x10d8] sm:$0xff]
      %v812 = vld [vmem:[%s232 + $0x10e0] sm:$0xff]
      %v813 = vld [vmem:[%s232 + $0x10e8] sm:$0xff]
      %v814 = vld [vmem:[%s232 + $0x10f0] sm:$0xff]
      %v815 = vld [vmem:[%s232 + $0x10f8] sm:$0xff]
      %v816 = vld [vmem:[%s232 + $0x1100] sm:$0xff]
      %v817 = vld [vmem:[%s232 + $0x1108] sm:$0xff]
      %v818 = vld [vmem:[%s232 + $0x1110] sm:$0xff]
      %v819 = vld [vmem:[%s232 + $0x1118] sm:$0xff]
      %v820 = vld [vmem:[%s232 + $0x1120] sm:$0xff]
      %v821 = vld [vmem:[%s232 + $0x1128] sm:$0xff]
      %v822 = vld [vmem:[%s232 + $0x1130] sm:$0xff]
      %v823 = vld [vmem:[%s232 + $0x1138] sm:$0xff]
      %v824 = vld [vmem:[%s232 + $0x1140] sm:$0xff]
      %v825 = vld [vmem:[%s232 + $0x1148] sm:$0xff]
      %v826 = vld [vmem:[%s232 + $0x1150] sm:$0xff]
      %v827 = vld [vmem:[%s232 + $0x1158] sm:$0xff]
      %v828 = vld [vmem:[%s232 + $0x1160] sm:$0xff]
      %v829 = vld [vmem:[%s232 + $0x1168] sm:$0xff]
      %v830 = vld [vmem:[%s232 + $0x1170] sm:$0xff]
      %v831 = vld [vmem:[%s232 + $0x1178] sm:$0xff]
      %v832 = vld [vmem:[%s232 + $0x1180] sm:$0xff]
      %v833 = vld [vmem:[%s232 + $0x1188] sm:$0xff]
      %v834 = vld [vmem:[%s232 + $0x1190] sm:$0xff]
      %v835 = vld [vmem:[%s232 + $0x1198] sm:$0xff]
      %v836 = vld [vmem:[%s232 + $0x11a0] sm:$0xff]
      %v837 = vld [vmem:[%s232 + $0x11a8] sm:$0xff]
      %v838 = vld [vmem:[%s232 + $0x11b0] sm:$0xff]
      %v839 = vld [vmem:[%s232 + $0x11b8] sm:$0xff]
      %v840 = vld [vmem:[%s232 + $0x11c0] sm:$0xff]
      %v841 = vld [vmem:[%s232 + $0x11c8] sm:$0xff]
      %v842 = vld [vmem:[%s232 + $0x11d0] sm:$0xff]
      %v843 = vld [vmem:[%s232 + $0x11d8] sm:$0xff]
      %v844 = vld [vmem:[%s232 + $0x11e0] sm:$0xff]
      %v845 = vld [vmem:[%s232 + $0x11e8] sm:$0xff]
      %v846 = vld [vmem:[%s232 + $0x11f0] sm:$0xff]
      %v847 = vld [vmem:[%s232 + $0x11f8] sm:$0xff]
      %v848 = vld [vmem:[%s232 + $0x1200] sm:$0xff]
      %v849 = vld [vmem:[%s232 + $0x1208] sm:$0xff]
      %v850 = vld [vmem:[%s232 + $0x1210] sm:$0xff]
      %v851 = vld [vmem:[%s232 + $0x1218] sm:$0xff]
      %v852 = vld [vmem:[%s232 + $0x1220] sm:$0xff]
      %v853 = vld [vmem:[%s232 + $0x1228] sm:$0xff]
      %v854 = vld [vmem:[%s232 + $0x1230] sm:$0xff]
      %v855 = vld [vmem:[%s232 + $0x1238] sm:$0xff]
      %v856 = vld [vmem:[%s232 + $0x1240] sm:$0xff]
      %v857 = vld [vmem:[%s232 + $0x1248] sm:$0xff]
      %v858 = vld [vmem:[%s232 + $0x1250] sm:$0xff]
      %v859 = vld [vmem:[%s232 + $0x1258] sm:$0xff]
      %v860 = vld [vmem:[%s232 + $0x1260] sm:$0xff]
      %v861 = vld [vmem:[%s232 + $0x1268] sm:$0xff]
      %v862 = vld [vmem:[%s232 + $0x1270] sm:$0xff]
      %v863 = vld [vmem:[%s232 + $0x1278] sm:$0xff]
      %v864 = vld [vmem:[%s232 + $0x1280] sm:$0xff]
      %v865 = vld [vmem:[%s232 + $0x1288] sm:$0xff]
      %v866 = vld [vmem:[%s232 + $0x1290] sm:$0xff]
      %v867 = vld [vmem:[%s232 + $0x1298] sm:$0xff]
      %v868 = vld [vmem:[%s232 + $0x12a0] sm:$0xff]
      %v869 = vld [vmem:[%s232 + $0x12a8] sm:$0xff]
      %v870 = vld [vmem:[%s232 + $0x12b0] sm:$0xff]
      %v871 = vld [vmem:[%s232 + $0x12b8] sm:$0xff]
      %v872 = vld [vmem:[%s232 + $0x12c0] sm:$0xff]
      %v873 = vld [vmem:[%s232 + $0x12c8] sm:$0xff]
      %v874 = vld [vmem:[%s232 + $0x12d0] sm:$0xff]
      %v875 = vld [vmem:[%s232 + $0x12d8] sm:$0xff]
      %v876 = vld [vmem:[%s232 + $0x12e0] sm:$0xff]
      %v877 = vld [vmem:[%s232 + $0x12e8] sm:$0xff]
      %v878 = vld [vmem:[%s232 + $0x12f0] sm:$0xff]
      %v879 = vld [vmem:[%s232 + $0x12f8] sm:$0xff]
      %v880 = vld [vmem:[%s232 + $0x1300] sm:$0xff]
      %v881 = vld [vmem:[%s232 + $0x1308] sm:$0xff]
      %v882 = vld [vmem:[%s232 + $0x1310] sm:$0xff]
      %v883 = vld [vmem:[%s232 + $0x1318] sm:$0xff]
      %v884 = vld [vmem:[%s232 + $0x1320] sm:$0xff]
      %v885 = vld [vmem:[%s232 + $0x1328] sm:$0xff]
      %v886 = vld [vmem:[%s232 + $0x1330] sm:$0xff]
      %v887 = vld [vmem:[%s232 + $0x1338] sm:$0xff]
      %v888 = vld [vmem:[%s232 + $0x1340] sm:$0xff]
      %v889 = vld [vmem:[%s232 + $0x1348] sm:$0xff]
      %v890 = vld [vmem:[%s232 + $0x1350] sm:$0xff]
      %v891 = vld [vmem:[%s232 + $0x1358] sm:$0xff]
      %v892 = vld [vmem:[%s232 + $0x1360] sm:$0xff]
      %v893 = vld [vmem:[%s232 + $0x1368] sm:$0xff]
      %v894 = vld [vmem:[%s232 + $0x1370] sm:$0xff]
      %v895 = vld [vmem:[%s232 + $0x1378] sm:$0xff]
      %v896 = vld [vmem:[%s232 + $0x1380] sm:$0xff]
      %v897 = vld [vmem:[%s232 + $0x1388] sm:$0xff]
      %v898 = vld [vmem:[%s232 + $0x1390] sm:$0xff]
      %v899 = vld [vmem:[%s232 + $0x1398] sm:$0xff]
      %v900 = vld [vmem:[%s232 + $0x13a0] sm:$0xff]
      %v901 = vld [vmem:[%s232 + $0x13a8] sm:$0xff]
      %v902 = vld [vmem:[%s232 + $0x13b0] sm:$0xff]
      %v903 = vld [vmem:[%s232 + $0x13b8] sm:$0xff]
      %v904 = vld [vmem:[%s232 + $0x13c0] sm:$0xff]
      %v905 = vld [vmem:[%s232 + $0x13c8] sm:$0xff]
      %v906 = vld [vmem:[%s232 + $0x13d0] sm:$0xff]
      %v907 = vld [vmem:[%s232 + $0x13d8] sm:$0xff]
      %v908 = vld [vmem:[%s232 + $0x13e0] sm:$0xff]
      %v909 = vld [vmem:[%s232 + $0x13e8] sm:$0xff]
      %v910 = vld [vmem:[%s232 + $0x13f0] sm:$0xff]
      %v911 = vld [vmem:[%s232 + $0x13f8] sm:$0xff]
      %v912 = vld [vmem:[%s232 + $0x1400] sm:$0xff]
      %v913 = vld [vmem:[%s232 + $0x1408] sm:$0xff]
      %v914 = vld [vmem:[%s232 + $0x1410] sm:$0xff]
      %v915 = vld [vmem:[%s232 + $0x1418] sm:$0xff]
      %v916 = vld [vmem:[%s232 + $0x1420] sm:$0xff]
      %v917 = vld [vmem:[%s232 + $0x1428] sm:$0xff]
      %v918 = vld [vmem:[%s232 + $0x1430] sm:$0xff]
      %v919 = vld [vmem:[%s232 + $0x1438] sm:$0xff]
      %v920 = vld [vmem:[%s232 + $0x1440] sm:$0xff]
      %v921 = vld [vmem:[%s232 + $0x1448] sm:$0xff]
      %v922 = vld [vmem:[%s232 + $0x1450] sm:$0xff]
      %v923 = vld [vmem:[%s232 + $0x1458] sm:$0xff]
      %v924 = vld [vmem:[%s232 + $0x1460] sm:$0xff]
      %v925 = vld [vmem:[%s232 + $0x1468] sm:$0xff]
      %v926 = vld [vmem:[%s232 + $0x1470] sm:$0xff]
      %v927 = vld [vmem:[%s232 + $0x1478] sm:$0xff]
      %v928 = vld [vmem:[%s232 + $0x1480] sm:$0xff]
      %v929 = vld [vmem:[%s232 + $0x1488] sm:$0xff]
      %v930 = vld [vmem:[%s232 + $0x1490] sm:$0xff]
      %v931 = vld [vmem:[%s232 + $0x1498] sm:$0xff]
      %v932 = vld [vmem:[%s232 + $0x14a0] sm:$0xff]
      %v933 = vld [vmem:[%s232 + $0x14a8] sm:$0xff]
      %v934 = vld [vmem:[%s232 + $0x14b0] sm:$0xff]
      %v935 = vld [vmem:[%s232 + $0x14b8] sm:$0xff]
      %v936 = vld [vmem:[%s232 + $0x14c0] sm:$0xff]
      %v937 = vld [vmem:[%s232 + $0x14c8] sm:$0xff]
      %v938 = vld [vmem:[%s232 + $0x14d0] sm:$0xff]
      %v939 = vld [vmem:[%s232 + $0x14d8] sm:$0xff]
      %v940 = vld [vmem:[%s232 + $0x14e0] sm:$0xff]
      %v941 = vld [vmem:[%s232 + $0x14e8] sm:$0xff]
      %v942 = vld [vmem:[%s232 + $0x14f0] sm:$0xff]
      %v943 = vld [vmem:[%s232 + $0x14f8] sm:$0xff]
      %v944 = vld [vmem:[%s232 + $0x1500] sm:$0xff]
      %v945 = vld [vmem:[%s232 + $0x1508] sm:$0xff]
      %v946 = vld [vmem:[%s232 + $0x1510] sm:$0xff]
      %v947 = vld [vmem:[%s232 + $0x1518] sm:$0xff]
      %v948 = vld [vmem:[%s232 + $0x1520] sm:$0xff]
      %v949 = vld [vmem:[%s232 + $0x1528] sm:$0xff]
      %v950 = vld [vmem:[%s232 + $0x1530] sm:$0xff]
      %v951 = vld [vmem:[%s232 + $0x1538] sm:$0xff]
      %v952 = vld [vmem:[%s232 + $0x1540] sm:$0xff]
      %v953 = vld [vmem:[%s232 + $0x1548] sm:$0xff]
      %v954 = vld [vmem:[%s232 + $0x1550] sm:$0xff]
      %v955 = vld [vmem:[%s232 + $0x1558] sm:$0xff]
      %v956 = vld [vmem:[%s232 + $0x1560] sm:$0xff]
      %v957 = vld [vmem:[%s232 + $0x1568] sm:$0xff]
      %v958 = vld [vmem:[%s232 + $0x1570] sm:$0xff]
      %v959 = vld [vmem:[%s232 + $0x1578] sm:$0xff]
      %v960 = vld [vmem:[%s232 + $0x1580] sm:$0xff]
      %v961 = vld [vmem:[%s232 + $0x1588] sm:$0xff]
      %v962 = vld [vmem:[%s232 + $0x1590] sm:$0xff]
      %v963 = vld [vmem:[%s232 + $0x1598] sm:$0xff]
      %v964 = vld [vmem:[%s232 + $0x15a0] sm:$0xff]
      %v965 = vld [vmem:[%s232 + $0x15a8] sm:$0xff]
      %v966 = vld [vmem:[%s232 + $0x15b0] sm:$0xff]
      %v967 = vld [vmem:[%s232 + $0x15b8] sm:$0xff]
      %v968 = vld [vmem:[%s232 + $0x15c0] sm:$0xff]
      %v969 = vld [vmem:[%s232 + $0x15c8] sm:$0xff]
      %v970 = vld [vmem:[%s232 + $0x15d0] sm:$0xff]
      %v971 = vld [vmem:[%s232 + $0x15d8] sm:$0xff]
      %v972 = vld [vmem:[%s232 + $0x15e0] sm:$0xff]
      %v973 = vld [vmem:[%s232 + $0x15e8] sm:$0xff]
      %v974 = vld [vmem:[%s232 + $0x15f0] sm:$0xff]
      %v975 = vld [vmem:[%s232 + $0x15f8] sm:$0xff]
      %v976 = vld [vmem:[%s232 + $0x1600] sm:$0xff]
      %v977 = vld [vmem:[%s232 + $0x1608] sm:$0xff]
      %v978 = vld [vmem:[%s232 + $0x1610] sm:$0xff]
      %v979 = vld [vmem:[%s232 + $0x1618] sm:$0xff]
      %v980 = vld [vmem:[%s232 + $0x1620] sm:$0xff]
      %v981 = vld [vmem:[%s232 + $0x1628] sm:$0xff]
      %v982 = vld [vmem:[%s232 + $0x1630] sm:$0xff]
      %v983 = vld [vmem:[%s232 + $0x1638] sm:$0xff]
      %v984 = vld [vmem:[%s232 + $0x1640] sm:$0xff]
      %v985 = vld [vmem:[%s232 + $0x1648] sm:$0xff]
      %v986 = vld [vmem:[%s232 + $0x1650] sm:$0xff]
      %v987 = vld [vmem:[%s232 + $0x1658] sm:$0xff]
      %v988 = vld [vmem:[%s232 + $0x1660] sm:$0xff]
      %v989 = vld [vmem:[%s232 + $0x1668] sm:$0xff]
      %v990 = vld [vmem:[%s232 + $0x1670] sm:$0xff]
      %v991 = vld [vmem:[%s232 + $0x1678] sm:$0xff]
      %v992 = vld [vmem:[%s232 + $0x1680] sm:$0xff]
      %v993 = vld [vmem:[%s232 + $0x1688] sm:$0xff]
      %v994 = vld [vmem:[%s232 + $0x1690] sm:$0xff]
      %v995 = vld [vmem:[%s232 + $0x1698] sm:$0xff]
      %v996 = vld [vmem:[%s232 + $0x16a0] sm:$0xff]
      %v997 = vld [vmem:[%s232 + $0x16a8] sm:$0xff]
      %v998 = vld [vmem:[%s232 + $0x16b0] sm:$0xff]
      %v999 = vld [vmem:[%s232 + $0x16b8] sm:$0xff]
      %v1000 = vld [vmem:[%s232 + $0x16c0] sm:$0xff]
      %v1001 = vld [vmem:[%s232 + $0x16c8] sm:$0xff]
      %v1002 = vld [vmem:[%s232 + $0x16d0] sm:$0xff]
      %v1003 = vld [vmem:[%s232 + $0x16d8] sm:$0xff]
      %v1004 = vld [vmem:[%s232 + $0x16e0] sm:$0xff]
      %v1005 = vld [vmem:[%s232 + $0x16e8] sm:$0xff]
      %v1006 = vld [vmem:[%s232 + $0x16f0] sm:$0xff]
      %v1007 = vld [vmem:[%s232 + $0x16f8] sm:$0xff]
      %v1008 = vld [vmem:[%s232 + $0x1700] sm:$0xff]
      %v1009 = vld [vmem:[%s232 + $0x1708] sm:$0xff]
      %v1010 = vld [vmem:[%s232 + $0x1710] sm:$0xff]
      %v1011 = vld [vmem:[%s232 + $0x1718] sm:$0xff]
      %v1012 = vld [vmem:[%s232 + $0x1720] sm:$0xff]
      %v1013 = vld [vmem:[%s232 + $0x1728] sm:$0xff]
      %v1014 = vld [vmem:[%s232 + $0x1730] sm:$0xff]
      %v1015 = vld [vmem:[%s232 + $0x1738] sm:$0xff]
      %v1016 = vld [vmem:[%s232 + $0x1740] sm:$0xff]
      %v1017 = vld [vmem:[%s232 + $0x1748] sm:$0xff]
      %v1018 = vld [vmem:[%s232 + $0x1750] sm:$0xff]
      %v1019 = vld [vmem:[%s232 + $0x1758] sm:$0xff]
      %v1020 = vld [vmem:[%s232 + $0x1760] sm:$0xff]
      %v1021 = vld [vmem:[%s232 + $0x1768] sm:$0xff]
      %v1022 = vld [vmem:[%s232 + $0x1770] sm:$0xff]
      %v1023 = vld [vmem:[%s232 + $0x1778] sm:$0xff]
      %v1024 = vld [vmem:[%s232 + $0x1780] sm:$0xff]
      %v1025 = vld [vmem:[%s232 + $0x1788] sm:$0xff]
      %v1026 = vld [vmem:[%s232 + $0x1790] sm:$0xff]
      %v1027 = vld [vmem:[%s232 + $0x1798] sm:$0xff]
      %v1028 = vld [vmem:[%s232 + $0x17a0] sm:$0xff]
      %v1029 = vld [vmem:[%s232 + $0x17a8] sm:$0xff]
      %v1030 = vld [vmem:[%s232 + $0x17b0] sm:$0xff]
      %v1031 = vld [vmem:[%s232 + $0x17b8] sm:$0xff]
      %v1032 = vld [vmem:[%s232 + $0x17c0] sm:$0xff]
      %v1033 = vld [vmem:[%s232 + $0x17c8] sm:$0xff]
      %v1034 = vld [vmem:[%s232 + $0x17d0] sm:$0xff]
      %v1035 = vld [vmem:[%s232 + $0x17d8] sm:$0xff]
      %v1036 = vld [vmem:[%s232 + $0x17e0] sm:$0xff]
      %v1037 = vld [vmem:[%s232 + $0x17e8] sm:$0xff]
      %v1038 = vld [vmem:[%s232 + $0x17f0] sm:$0xff]
      %v1039 = vld [vmem:[%s232 + $0x17f8] sm:$0xff]
      %1040 = vmatprep.subr.mxu0 %v363
      %1041 = vmatpush1.xpose.msra.mxu0 %v362
      %1042 = vmatprep.subr.mxu0 %v357
      %1043 = vmatpush1.xpose.msra.mxu0 %v356
      %1044 = vmatprep.subr.mxu0 %v351
      %1045 = vmatpush1.xpose.msra.mxu0 %v350
      %1046 = vmatprep.subr.mxu0 %v345
      %1047 = vmatpush1.xpose.msra.mxu0 %v344
      %1048 = vmatprep.subr.mxu0 %v339
      %1049 = vmatpush1.xpose.msra.mxu0 %v338
      %1050 = vmatprep.subr.mxu0 %v333
      %1051 = vmatpush1.xpose.msra.mxu0 %v332
      %1052 = vmatprep.subr.mxu0 %v327
      %1053 = vmatpush1.xpose.msra.mxu0 %v326
      %1054 = vmatprep.subr.mxu0 %v321
      %1055 = vmatpush1.xpose.msra.mxu0 %v320
      %1056 = vmatprep.subr.mxu0 %v315
      %1057 = vmatpush1.xpose.msra.mxu0 %v314
      %1058 = vmatprep.subr.mxu0 %v309
      %1059 = vmatpush1.xpose.msra.mxu0 %v308
      %1060 = vmatprep.subr.mxu0 %v303
      %1061 = vmatpush1.xpose.msra.mxu0 %v302
      %1062 = vmatprep.subr.mxu0 %v297
      %1063 = vmatpush1.xpose.msra.mxu0 %v296
      %1064 = vmatprep.subr.mxu0 %v291
      %1065 = vmatpush1.xpose.msra.mxu0 %v290
      %1066 = vmatprep.subr.mxu0 %v285
      %1067 = vmatpush1.xpose.msra.mxu0 %v284
      %1068 = vmatprep.subr.mxu0 %v279
      %1069 = vmatpush1.xpose.msra.mxu0 %v278
      %1070 = vmatprep.subr.mxu0 %v273
      %1071 = vmatpush1.xpose.msra.mxu0 %v272
      %1072 = vmatprep.subr.mxu0 %v459
      %1073 = vmatpush2.xpose.msra.mxu0 %v458
      %1074 = vmatprep.subr.mxu0 %v453
      %1075 = vmatpush2.xpose.msra.mxu0 %v452
      %1076 = vmatprep.subr.mxu0 %v447
      %1077 = vmatpush2.xpose.msra.mxu0 %v446
      %1078 = vmatprep.subr.mxu0 %v441
      %1079 = vmatpush2.xpose.msra.mxu0 %v440
      %1080 = vmatprep.subr.mxu0 %v435
      %1081 = vmatpush2.xpose.msra.mxu0 %v434
      %1082 = vmatprep.subr.mxu0 %v429
      %1083 = vmatpush2.xpose.msra.mxu0 %v428
      %1084 = vmatprep.subr.mxu0 %v423
      %1085 = vmatpush2.xpose.msra.mxu0 %v422
      %1086 = vmatprep.subr.mxu0 %v417
      %1087 = vmatpush2.xpose.msra.mxu0 %v416
      %1088 = vmatprep.subr.mxu0 %v411
      %1089 = vmatpush2.xpose.msra.mxu0 %v410
      %1090 = vmatprep.subr.mxu0 %v405
      %1091 = vmatpush2.xpose.msra.mxu0 %v404
      %1092 = vmatprep.subr.mxu0 %v399
      %1093 = vmatpush2.xpose.msra.mxu0 %v398
      %1094 = vmatprep.subr.mxu0 %v393
      %1095 = vmatpush2.xpose.msra.mxu0 %v392
      %1096 = vmatprep.subr.mxu0 %v387
      %1097 = vmatpush2.xpose.msra.mxu0 %v386
      %1098 = vmatprep.subr.mxu0 %v381
      %1099 = vmatpush2.xpose.msra.mxu0 %v380
      %1100 = vmatprep.subr.mxu0 %v375
      %1101 = vmatpush2.xpose.msra.mxu0 %v374
      %1102 = vmatprep.subr.mxu0 %v369
      %1103 = vmatpush2.xpose.msra.mxu0 %v368
      %1104 = vmatprep.mubr.f32.mxu0 %v267
      %1105 = vmatmul.mubr.f32.gmra.mxu0 %v266
      %v1106 = vpop.f32.mrf.mxu0
      %v1107 = vadd.f32 0.0, %v1106
      %v1108 = vpop.f32.mrf.mxu0
      %v1109 = vadd.f32 0.0, %v1108
      %1110 = vdwg.mxu0
      %1111 = vmatprep.subr.mxu0 %v365
      %1112 = vmatpush1.xpose.msra.mxu0 %v364
      %1113 = vmatprep.subr.mxu0 %v359
      %1114 = vmatpush1.xpose.msra.mxu0 %v358
      %1115 = vmatprep.subr.mxu0 %v353
      %1116 = vmatpush1.xpose.msra.mxu0 %v352
      %1117 = vmatprep.subr.mxu0 %v347
      %1118 = vmatpush1.xpose.msra.mxu0 %v346
      %1119 = vmatprep.subr.mxu0 %v341
      %1120 = vmatpush1.xpose.msra.mxu0 %v340
      %1121 = vmatprep.subr.mxu0 %v335
      %1122 = vmatpush1.xpose.msra.mxu0 %v334
      %1123 = vmatprep.subr.mxu0 %v329
      %1124 = vmatpush1.xpose.msra.mxu0 %v328
      %1125 = vmatprep.subr.mxu0 %v323
      %1126 = vmatpush1.xpose.msra.mxu0 %v322
      %1127 = vmatprep.subr.mxu0 %v317
      %1128 = vmatpush1.xpose.msra.mxu0 %v316
      %1129 = vmatprep.subr.mxu0 %v311
      %1130 = vmatpush1.xpose.msra.mxu0 %v310
      %1131 = vmatprep.subr.mxu0 %v305
      %1132 = vmatpush1.xpose.msra.mxu0 %v304
      %1133 = vmatprep.subr.mxu0 %v299
      %1134 = vmatpush1.xpose.msra.mxu0 %v298
      %1135 = vmatprep.subr.mxu0 %v293
      %1136 = vmatpush1.xpose.msra.mxu0 %v292
      %1137 = vmatprep.subr.mxu0 %v287
      %1138 = vmatpush1.xpose.msra.mxu0 %v286
      %1139 = vmatprep.subr.mxu0 %v281
      %1140 = vmatpush1.xpose.msra.mxu0 %v280
      %1141 = vmatprep.subr.mxu0 %v275
      %1142 = vmatpush1.xpose.msra.mxu0 %v274
      %1143 = vmatprep.subr.mxu0 %v461
      %1144 = vmatpush2.xpose.msra.mxu0 %v460
      %1145 = vmatprep.subr.mxu0 %v455
      %1146 = vmatpush2.xpose.msra.mxu0 %v454
      %1147 = vmatprep.subr.mxu0 %v449
      %1148 = vmatpush2.xpose.msra.mxu0 %v448
      %1149 = vmatprep.subr.mxu0 %v443
      %1150 = vmatpush2.xpose.msra.mxu0 %v442
      %1151 = vmatprep.subr.mxu0 %v437
      %1152 = vmatpush2.xpose.msra.mxu0 %v436
      %1153 = vmatprep.subr.mxu0 %v431
      %1154 = vmatpush2.xpose.msra.mxu0 %v430
      %1155 = vmatprep.subr.mxu0 %v425
      %1156 = vmatpush2.xpose.msra.mxu0 %v424
      %1157 = vmatprep.subr.mxu0 %v419
      %1158 = vmatpush2.xpose.msra.mxu0 %v418
      %1159 = vmatprep.subr.mxu0 %v413
      %1160 = vmatpush2.xpose.msra.mxu0 %v412
      %1161 = vmatprep.subr.mxu0 %v407
      %1162 = vmatpush2.xpose.msra.mxu0 %v406
      %1163 = vmatprep.subr.mxu0 %v401
      %1164 = vmatpush2.xpose.msra.mxu0 %v400
      %1165 = vmatprep.subr.mxu0 %v395
      %1166 = vmatpush2.xpose.msra.mxu0 %v394
      %1167 = vmatprep.subr.mxu0 %v389
      %1168 = vmatpush2.xpose.msra.mxu0 %v388
      %1169 = vmatprep.subr.mxu0 %v383
      %1170 = vmatpush2.xpose.msra.mxu0 %v382
      %1171 = vmatprep.subr.mxu0 %v377
      %1172 = vmatpush2.xpose.msra.mxu0 %v376
      %1173 = vmatprep.subr.mxu0 %v371
      %1174 = vmatpush2.xpose.msra.mxu0 %v370
      %1175 = vmatprep.mubr.f32.mxu0 %v269
      %1176 = vmatmul.mubr.f32.gmra.mxu0 %v268
      %v1177 = vpop.f32.mrf.mxu0
      %v1178 = vadd.f32 %v1107, %v1177
      %v1179 = vpop.f32.mrf.mxu0
      %v1180 = vadd.f32 %v1109, %v1179
      %1181 = vdwg.mxu0
      %1182 = vmatprep.subr.mxu0 %v367
      %1183 = vmatpush1.xpose.msra.mxu0 %v366
      %1184 = vmatprep.subr.mxu0 %v361
      %1185 = vmatpush1.xpose.msra.mxu0 %v360
      %1186 = vmatprep.subr.mxu0 %v355
      %1187 = vmatpush1.xpose.msra.mxu0 %v354
      %1188 = vmatprep.subr.mxu0 %v349
      %1189 = vmatpush1.xpose.msra.mxu0 %v348
      %1190 = vmatprep.subr.mxu0 %v343
      %1191 = vmatpush1.xpose.msra.mxu0 %v342
      %1192 = vmatprep.subr.mxu0 %v337
      %1193 = vmatpush1.xpose.msra.mxu0 %v336
      %1194 = vmatprep.subr.mxu0 %v331
      %1195 = vmatpush1.xpose.msra.mxu0 %v330
      %1196 = vmatprep.subr.mxu0 %v325
      %1197 = vmatpush1.xpose.msra.mxu0 %v324
      %1198 = vmatprep.subr.mxu0 %v319
      %1199 = vmatpush1.xpose.msra.mxu0 %v318
      %1200 = vmatprep.subr.mxu0 %v313
      %1201 = vmatpush1.xpose.msra.mxu0 %v312
      %1202 = vmatprep.subr.mxu0 %v307
      %1203 = vmatpush1.xpose.msra.mxu0 %v306
      %1204 = vmatprep.subr.mxu0 %v301
      %1205 = vmatpush1.xpose.msra.mxu0 %v300
      %1206 = vmatprep.subr.mxu0 %v295
      %1207 = vmatpush1.xpose.msra.mxu0 %v294
      %1208 = vmatprep.subr.mxu0 %v289
      %1209 = vmatpush1.xpose.msra.mxu0 %v288
      %1210 = vmatprep.subr.mxu0 %v283
      %1211 = vmatpush1.xpose.msra.mxu0 %v282
      %1212 = vmatprep.subr.mxu0 %v277
      %1213 = vmatpush1.xpose.msra.mxu0 %v276
      %1214 = vmatprep.subr.mxu0 %v463
      %1215 = vmatpush2.xpose.msra.mxu0 %v462
      %1216 = vmatprep.subr.mxu0 %v457
      %1217 = vmatpush2.xpose.msra.mxu0 %v456
      %1218 = vmatprep.subr.mxu0 %v451
      %1219 = vmatpush2.xpose.msra.mxu0 %v450
      %1220 = vmatprep.subr.mxu0 %v445
      %1221 = vmatpush2.xpose.msra.mxu0 %v444
      %1222 = vmatprep.subr.mxu0 %v439
      %1223 = vmatpush2.xpose.msra.mxu0 %v438
      %1224 = vmatprep.subr.mxu0 %v433
      %1225 = vmatpush2.xpose.msra.mxu0 %v432
      %1226 = vmatprep.subr.mxu0 %v427
      %1227 = vmatpush2.xpose.msra.mxu0 %v426
      %1228 = vmatprep.subr.mxu0 %v421
      %1229 = vmatpush2.xpose.msra.mxu0 %v420
      %1230 = vmatprep.subr.mxu0 %v415
      %1231 = vmatpush2.xpose.msra.mxu0 %v414
      %1232 = vmatprep.subr.mxu0 %v409
      %1233 = vmatpush2.xpose.msra.mxu0 %v408
      %1234 = vmatprep.subr.mxu0 %v403
      %1235 = vmatpush2.xpose.msra.mxu0 %v402
      %1236 = vmatprep.subr.mxu0 %v397
      %1237 = vmatpush2.xpose.msra.mxu0 %v396
      %1238 = vmatprep.subr.mxu0 %v391
      %1239 = vmatpush2.xpose.msra.mxu0 %v390
      %1240 = vmatprep.subr.mxu0 %v385
      %1241 = vmatpush2.xpose.msra.mxu0 %v384
      %1242 = vmatprep.subr.mxu0 %v379
      %1243 = vmatpush2.xpose.msra.mxu0 %v378
      %1244 = vmatprep.subr.mxu0 %v373
      %1245 = vmatpush2.xpose.msra.mxu0 %v372
      %1246 = vmatprep.mubr.f32.mxu0 %v271
      %1247 = vmatmul.mubr.f32.gmra.mxu0 %v270
      %v1248 = vpop.f32.mrf.mxu0
      %v1249 = vadd.f32 %v1178, %v1248
      %v1250 = vpop.f32.mrf.mxu0
      %v1251 = vadd.f32 %v1180, %v1250
      %1252 = vdwg.mxu0
      %1253 = vmatprep.subr.mxu0 %v555
      %1254 = vmatpush1.xpose.msra.mxu0 %v554
      %1255 = vmatprep.subr.mxu0 %v549
      %1256 = vmatpush1.xpose.msra.mxu0 %v548
      %1257 = vmatprep.subr.mxu0 %v543
      %1258 = vmatpush1.xpose.msra.mxu0 %v542
      %1259 = vmatprep.subr.mxu0 %v537
      %1260 = vmatpush1.xpose.msra.mxu0 %v536
      %1261 = vmatprep.subr.mxu0 %v531
      %1262 = vmatpush1.xpose.msra.mxu0 %v530
      %1263 = vmatprep.subr.mxu0 %v525
      %1264 = vmatpush1.xpose.msra.mxu0 %v524
      %1265 = vmatprep.subr.mxu0 %v519
      %1266 = vmatpush1.xpose.msra.mxu0 %v518
      %1267 = vmatprep.subr.mxu0 %v513
      %1268 = vmatpush1.xpose.msra.mxu0 %v512
      %1269 = vmatprep.subr.mxu0 %v507
      %1270 = vmatpush1.xpose.msra.mxu0 %v506
      %1271 = vmatprep.subr.mxu0 %v501
      %1272 = vmatpush1.xpose.msra.mxu0 %v500
      %1273 = vmatprep.subr.mxu0 %v495
      %1274 = vmatpush1.xpose.msra.mxu0 %v494
      %1275 = vmatprep.subr.mxu0 %v489
      %1276 = vmatpush1.xpose.msra.mxu0 %v488
      %1277 = vmatprep.subr.mxu0 %v483
      %1278 = vmatpush1.xpose.msra.mxu0 %v482
      %1279 = vmatprep.subr.mxu0 %v477
      %1280 = vmatpush1.xpose.msra.mxu0 %v476
      %1281 = vmatprep.subr.mxu0 %v471
      %1282 = vmatpush1.xpose.msra.mxu0 %v470
      %1283 = vmatprep.subr.mxu0 %v465
      %1284 = vmatpush1.xpose.msra.mxu0 %v464
      %1285 = vmatprep.subr.mxu0 %v651
      %1286 = vmatpush2.xpose.msra.mxu0 %v650
      %1287 = vmatprep.subr.mxu0 %v645
      %1288 = vmatpush2.xpose.msra.mxu0 %v644
      %1289 = vmatprep.subr.mxu0 %v639
      %1290 = vmatpush2.xpose.msra.mxu0 %v638
      %1291 = vmatprep.subr.mxu0 %v633
      %1292 = vmatpush2.xpose.msra.mxu0 %v632
      %1293 = vmatprep.subr.mxu0 %v627
      %1294 = vmatpush2.xpose.msra.mxu0 %v626
      %1295 = vmatprep.subr.mxu0 %v621
      %1296 = vmatpush2.xpose.msra.mxu0 %v620
      %1297 = vmatprep.subr.mxu0 %v615
      %1298 = vmatpush2.xpose.msra.mxu0 %v614
      %1299 = vmatprep.subr.mxu0 %v609
      %1300 = vmatpush2.xpose.msra.mxu0 %v608
      %1301 = vmatprep.subr.mxu0 %v603
      %1302 = vmatpush2.xpose.msra.mxu0 %v602
      %1303 = vmatprep.subr.mxu0 %v597
      %1304 = vmatpush2.xpose.msra.mxu0 %v596
      %1305 = vmatprep.subr.mxu0 %v591
      %1306 = vmatpush2.xpose.msra.mxu0 %v590
      %1307 = vmatprep.subr.mxu0 %v585
      %1308 = vmatpush2.xpose.msra.mxu0 %v584
      %1309 = vmatprep.subr.mxu0 %v579
      %1310 = vmatpush2.xpose.msra.mxu0 %v578
      %1311 = vmatprep.subr.mxu0 %v573
      %1312 = vmatpush2.xpose.msra.mxu0 %v572
      %1313 = vmatprep.subr.mxu0 %v567
      %1314 = vmatpush2.xpose.msra.mxu0 %v566
      %1315 = vmatprep.subr.mxu0 %v561
      %1316 = vmatpush2.xpose.msra.mxu0 %v560
      %1317 = vmatprep.mubr.f32.mxu0 %v267
      %1318 = vmatmul.mubr.f32.gmra.mxu0 %v266
      %v1319 = vpop.f32.mrf.mxu0
      %v1320 = vadd.f32 0.0, %v1319
      %v1321 = vpop.f32.mrf.mxu0
      %v1322 = vadd.f32 0.0, %v1321
      %1323 = vdwg.mxu0
      %1324 = vmatprep.subr.mxu0 %v557
      %1325 = vmatpush1.xpose.msra.mxu0 %v556
      %1326 = vmatprep.subr.mxu0 %v551
      %1327 = vmatpush1.xpose.msra.mxu0 %v550
      %1328 = vmatprep.subr.mxu0 %v545
      %1329 = vmatpush1.xpose.msra.mxu0 %v544
      %1330 = vmatprep.subr.mxu0 %v539
      %1331 = vmatpush1.xpose.msra.mxu0 %v538
      %1332 = vmatprep.subr.mxu0 %v533
      %1333 = vmatpush1.xpose.msra.mxu0 %v532
      %1334 = vmatprep.subr.mxu0 %v527
      %1335 = vmatpush1.xpose.msra.mxu0 %v526
      %1336 = vmatprep.subr.mxu0 %v521
      %1337 = vmatpush1.xpose.msra.mxu0 %v520
      %1338 = vmatprep.subr.mxu0 %v515
      %1339 = vmatpush1.xpose.msra.mxu0 %v514
      %1340 = vmatprep.subr.mxu0 %v509
      %1341 = vmatpush1.xpose.msra.mxu0 %v508
      %1342 = vmatprep.subr.mxu0 %v503
      %1343 = vmatpush1.xpose.msra.mxu0 %v502
      %1344 = vmatprep.subr.mxu0 %v497
      %1345 = vmatpush1.xpose.msra.mxu0 %v496
      %1346 = vmatprep.subr.mxu0 %v491
      %1347 = vmatpush1.xpose.msra.mxu0 %v490
      %1348 = vmatprep.subr.mxu0 %v485
      %1349 = vmatpush1.xpose.msra.mxu0 %v484
      %1350 = vmatprep.subr.mxu0 %v479
      %1351 = vmatpush1.xpose.msra.mxu0 %v478
      %1352 = vmatprep.subr.mxu0 %v473
      %1353 = vmatpush1.xpose.msra.mxu0 %v472
      %1354 = vmatprep.subr.mxu0 %v467
      %1355 = vmatpush1.xpose.msra.mxu0 %v466
      %1356 = vmatprep.subr.mxu0 %v653
      %1357 = vmatpush2.xpose.msra.mxu0 %v652
      %1358 = vmatprep.subr.mxu0 %v647
      %1359 = vmatpush2.xpose.msra.mxu0 %v646
      %1360 = vmatprep.subr.mxu0 %v641
      %1361 = vmatpush2.xpose.msra.mxu0 %v640
      %1362 = vmatprep.subr.mxu0 %v635
      %1363 = vmatpush2.xpose.msra.mxu0 %v634
      %1364 = vmatprep.subr.mxu0 %v629
      %1365 = vmatpush2.xpose.msra.mxu0 %v628
      %1366 = vmatprep.subr.mxu0 %v623
      %1367 = vmatpush2.xpose.msra.mxu0 %v622
      %1368 = vmatprep.subr.mxu0 %v617
      %1369 = vmatpush2.xpose.msra.mxu0 %v616
      %1370 = vmatprep.subr.mxu0 %v611
      %1371 = vmatpush2.xpose.msra.mxu0 %v610
      %1372 = vmatprep.subr.mxu0 %v605
      %1373 = vmatpush2.xpose.msra.mxu0 %v604
      %1374 = vmatprep.subr.mxu0 %v599
      %1375 = vmatpush2.xpose.msra.mxu0 %v598
      %1376 = vmatprep.subr.mxu0 %v593
      %1377 = vmatpush2.xpose.msra.mxu0 %v592
      %1378 = vmatprep.subr.mxu0 %v587
      %1379 = vmatpush2.xpose.msra.mxu0 %v586
      %1380 = vmatprep.subr.mxu0 %v581
      %1381 = vmatpush2.xpose.msra.mxu0 %v580
      %1382 = vmatprep.subr.mxu0 %v575
      %1383 = vmatpush2.xpose.msra.mxu0 %v574
      %1384 = vmatprep.subr.mxu0 %v569
      %1385 = vmatpush2.xpose.msra.mxu0 %v568
      %1386 = vmatprep.subr.mxu0 %v563
      %1387 = vmatpush2.xpose.msra.mxu0 %v562
      %1388 = vmatprep.mubr.f32.mxu0 %v269
      %1389 = vmatmul.mubr.f32.gmra.mxu0 %v268
      %v1390 = vpop.f32.mrf.mxu0
      %v1391 = vadd.f32 %v1320, %v1390
      %v1392 = vpop.f32.mrf.mxu0
      %v1393 = vadd.f32 %v1322, %v1392
      %1394 = vdwg.mxu0
      %1395 = vmatprep.subr.mxu0 %v559
      %1396 = vmatpush1.xpose.msra.mxu0 %v558
      %1397 = vmatprep.subr.mxu0 %v553
      %1398 = vmatpush1.xpose.msra.mxu0 %v552
      %1399 = vmatprep.subr.mxu0 %v547
      %1400 = vmatpush1.xpose.msra.mxu0 %v546
      %1401 = vmatprep.subr.mxu0 %v541
      %1402 = vmatpush1.xpose.msra.mxu0 %v540
      %1403 = vmatprep.subr.mxu0 %v535
      %1404 = vmatpush1.xpose.msra.mxu0 %v534
      %1405 = vmatprep.subr.mxu0 %v529
      %1406 = vmatpush1.xpose.msra.mxu0 %v528
      %1407 = vmatprep.subr.mxu0 %v523
      %1408 = vmatpush1.xpose.msra.mxu0 %v522
      %1409 = vmatprep.subr.mxu0 %v517
      %1410 = vmatpush1.xpose.msra.mxu0 %v516
      %1411 = vmatprep.subr.mxu0 %v511
      %1412 = vmatpush1.xpose.msra.mxu0 %v510
      %1413 = vmatprep.subr.mxu0 %v505
      %1414 = vmatpush1.xpose.msra.mxu0 %v504
      %1415 = vmatprep.subr.mxu0 %v499
      %1416 = vmatpush1.xpose.msra.mxu0 %v498
      %1417 = vmatprep.subr.mxu0 %v493
      %1418 = vmatpush1.xpose.msra.mxu0 %v492
      %1419 = vmatprep.subr.mxu0 %v487
      %1420 = vmatpush1.xpose.msra.mxu0 %v486
      %1421 = vmatprep.subr.mxu0 %v481
      %1422 = vmatpush1.xpose.msra.mxu0 %v480
      %1423 = vmatprep.subr.mxu0 %v475
      %1424 = vmatpush1.xpose.msra.mxu0 %v474
      %1425 = vmatprep.subr.mxu0 %v469
      %1426 = vmatpush1.xpose.msra.mxu0 %v468
      %1427 = vmatprep.subr.mxu0 %v655
      %1428 = vmatpush2.xpose.msra.mxu0 %v654
      %1429 = vmatprep.subr.mxu0 %v649
      %1430 = vmatpush2.xpose.msra.mxu0 %v648
      %1431 = vmatprep.subr.mxu0 %v643
      %1432 = vmatpush2.xpose.msra.mxu0 %v642
      %1433 = vmatprep.subr.mxu0 %v637
      %1434 = vmatpush2.xpose.msra.mxu0 %v636
      %1435 = vmatprep.subr.mxu0 %v631
      %1436 = vmatpush2.xpose.msra.mxu0 %v630
      %1437 = vmatprep.subr.mxu0 %v625
      %1438 = vmatpush2.xpose.msra.mxu0 %v624
      %1439 = vmatprep.subr.mxu0 %v619
      %1440 = vmatpush2.xpose.msra.mxu0 %v618
      %1441 = vmatprep.subr.mxu0 %v613
      %1442 = vmatpush2.xpose.msra.mxu0 %v612
      %1443 = vmatprep.subr.mxu0 %v607
      %1444 = vmatpush2.xpose.msra.mxu0 %v606
      %1445 = vmatprep.subr.mxu0 %v601
      %1446 = vmatpush2.xpose.msra.mxu0 %v600
      %1447 = vmatprep.subr.mxu0 %v595
      %1448 = vmatpush2.xpose.msra.mxu0 %v594
      %1449 = vmatprep.subr.mxu0 %v589
      %1450 = vmatpush2.xpose.msra.mxu0 %v588
      %1451 = vmatprep.subr.mxu0 %v583
      %1452 = vmatpush2.xpose.msra.mxu0 %v582
      %1453 = vmatprep.subr.mxu0 %v577
      %1454 = vmatpush2.xpose.msra.mxu0 %v576
      %1455 = vmatprep.subr.mxu0 %v571
      %1456 = vmatpush2.xpose.msra.mxu0 %v570
      %1457 = vmatprep.subr.mxu0 %v565
      %1458 = vmatpush2.xpose.msra.mxu0 %v564
      %1459 = vmatprep.mubr.f32.mxu0 %v271
      %1460 = vmatmul.mubr.f32.gmra.mxu0 %v270
      %v1461 = vpop.f32.mrf.mxu0
      %v1462 = vadd.f32 %v1391, %v1461
      %v1463 = vpop.f32.mrf.mxu0
      %v1464 = vadd.f32 %v1393, %v1463
      %1465 = vdwg.mxu0
      %1466 = vmatprep.subr.mxu0 %v747
      %1467 = vmatpush1.xpose.msra.mxu0 %v746
      %1468 = vmatprep.subr.mxu0 %v741
      %1469 = vmatpush1.xpose.msra.mxu0 %v740
      %1470 = vmatprep.subr.mxu0 %v735
      %1471 = vmatpush1.xpose.msra.mxu0 %v734
      %1472 = vmatprep.subr.mxu0 %v729
      %1473 = vmatpush1.xpose.msra.mxu0 %v728
      %1474 = vmatprep.subr.mxu0 %v723
      %1475 = vmatpush1.xpose.msra.mxu0 %v722
      %1476 = vmatprep.subr.mxu0 %v717
      %1477 = vmatpush1.xpose.msra.mxu0 %v716
      %1478 = vmatprep.subr.mxu0 %v711
      %1479 = vmatpush1.xpose.msra.mxu0 %v710
      %1480 = vmatprep.subr.mxu0 %v705
      %1481 = vmatpush1.xpose.msra.mxu0 %v704
      %1482 = vmatprep.subr.mxu0 %v699
      %1483 = vmatpush1.xpose.msra.mxu0 %v698
      %1484 = vmatprep.subr.mxu0 %v693
      %1485 = vmatpush1.xpose.msra.mxu0 %v692
      %1486 = vmatprep.subr.mxu0 %v687
      %1487 = vmatpush1.xpose.msra.mxu0 %v686
      %1488 = vmatprep.subr.mxu0 %v681
      %1489 = vmatpush1.xpose.msra.mxu0 %v680
      %1490 = vmatprep.subr.mxu0 %v675
      %1491 = vmatpush1.xpose.msra.mxu0 %v674
      %1492 = vmatprep.subr.mxu0 %v669
      %1493 = vmatpush1.xpose.msra.mxu0 %v668
      %1494 = vmatprep.subr.mxu0 %v663
      %1495 = vmatpush1.xpose.msra.mxu0 %v662
      %1496 = vmatprep.subr.mxu0 %v657
      %1497 = vmatpush1.xpose.msra.mxu0 %v656
      %1498 = vmatprep.subr.mxu0 %v843
      %1499 = vmatpush2.xpose.msra.mxu0 %v842
      %1500 = vmatprep.subr.mxu0 %v837
      %1501 = vmatpush2.xpose.msra.mxu0 %v836
      %1502 = vmatprep.subr.mxu0 %v831
      %1503 = vmatpush2.xpose.msra.mxu0 %v830
      %1504 = vmatprep.subr.mxu0 %v825
      %1505 = vmatpush2.xpose.msra.mxu0 %v824
      %1506 = vmatprep.subr.mxu0 %v819
      %1507 = vmatpush2.xpose.msra.mxu0 %v818
      %1508 = vmatprep.subr.mxu0 %v813
      %1509 = vmatpush2.xpose.msra.mxu0 %v812
      %1510 = vmatprep.subr.mxu0 %v807
      %1511 = vmatpush2.xpose.msra.mxu0 %v806
      %1512 = vmatprep.subr.mxu0 %v801
      %1513 = vmatpush2.xpose.msra.mxu0 %v800
      %1514 = vmatprep.subr.mxu0 %v795
      %1515 = vmatpush2.xpose.msra.mxu0 %v794
      %1516 = vmatprep.subr.mxu0 %v789
      %1517 = vmatpush2.xpose.msra.mxu0 %v788
      %1518 = vmatprep.subr.mxu0 %v783
      %1519 = vmatpush2.xpose.msra.mxu0 %v782
      %1520 = vmatprep.subr.mxu0 %v777
      %1521 = vmatpush2.xpose.msra.mxu0 %v776
      %1522 = vmatprep.subr.mxu0 %v771
      %1523 = vmatpush2.xpose.msra.mxu0 %v770
      %1524 = vmatprep.subr.mxu0 %v765
      %1525 = vmatpush2.xpose.msra.mxu0 %v764
      %1526 = vmatprep.subr.mxu0 %v759
      %1527 = vmatpush2.xpose.msra.mxu0 %v758
      %1528 = vmatprep.subr.mxu0 %v753
      %1529 = vmatpush2.xpose.msra.mxu0 %v752
      %1530 = vmatprep.mubr.f32.mxu0 %v267
      %1531 = vmatmul.mubr.f32.gmra.mxu0 %v266
      %v1532 = vpop.f32.mrf.mxu0
      %v1533 = vadd.f32 0.0, %v1532
      %v1534 = vpop.f32.mrf.mxu0
      %v1535 = vadd.f32 0.0, %v1534
      %1536 = vdwg.mxu0
      %1537 = vmatprep.subr.mxu0 %v749
      %1538 = vmatpush1.xpose.msra.mxu0 %v748
      %1539 = vmatprep.subr.mxu0 %v743
      %1540 = vmatpush1.xpose.msra.mxu0 %v742
      %1541 = vmatprep.subr.mxu0 %v737
      %1542 = vmatpush1.xpose.msra.mxu0 %v736
      %1543 = vmatprep.subr.mxu0 %v731
      %1544 = vmatpush1.xpose.msra.mxu0 %v730
      %1545 = vmatprep.subr.mxu0 %v725
      %1546 = vmatpush1.xpose.msra.mxu0 %v724
      %1547 = vmatprep.subr.mxu0 %v719
      %1548 = vmatpush1.xpose.msra.mxu0 %v718
      %1549 = vmatprep.subr.mxu0 %v713
      %1550 = vmatpush1.xpose.msra.mxu0 %v712
      %1551 = vmatprep.subr.mxu0 %v707
      %1552 = vmatpush1.xpose.msra.mxu0 %v706
      %1553 = vmatprep.subr.mxu0 %v701
      %1554 = vmatpush1.xpose.msra.mxu0 %v700
      %1555 = vmatprep.subr.mxu0 %v695
      %1556 = vmatpush1.xpose.msra.mxu0 %v694
      %1557 = vmatprep.subr.mxu0 %v689
      %1558 = vmatpush1.xpose.msra.mxu0 %v688
      %1559 = vmatprep.subr.mxu0 %v683
      %1560 = vmatpush1.xpose.msra.mxu0 %v682
      %1561 = vmatprep.subr.mxu0 %v677
      %1562 = vmatpush1.xpose.msra.mxu0 %v676
      %1563 = vmatprep.subr.mxu0 %v671
      %1564 = vmatpush1.xpose.msra.mxu0 %v670
      %1565 = vmatprep.subr.mxu0 %v665
      %1566 = vmatpush1.xpose.msra.mxu0 %v664
      %1567 = vmatprep.subr.mxu0 %v659
      %1568 = vmatpush1.xpose.msra.mxu0 %v658
      %1569 = vmatprep.subr.mxu0 %v845
      %1570 = vmatpush2.xpose.msra.mxu0 %v844
      %1571 = vmatprep.subr.mxu0 %v839
      %1572 = vmatpush2.xpose.msra.mxu0 %v838
      %1573 = vmatprep.subr.mxu0 %v833
      %1574 = vmatpush2.xpose.msra.mxu0 %v832
      %1575 = vmatprep.subr.mxu0 %v827
      %1576 = vmatpush2.xpose.msra.mxu0 %v826
      %1577 = vmatprep.subr.mxu0 %v821
      %1578 = vmatpush2.xpose.msra.mxu0 %v820
      %1579 = vmatprep.subr.mxu0 %v815
      %1580 = vmatpush2.xpose.msra.mxu0 %v814
      %1581 = vmatprep.subr.mxu0 %v809
      %1582 = vmatpush2.xpose.msra.mxu0 %v808
      %1583 = vmatprep.subr.mxu0 %v803
      %1584 = vmatpush2.xpose.msra.mxu0 %v802
      %1585 = vmatprep.subr.mxu0 %v797
      %1586 = vmatpush2.xpose.msra.mxu0 %v796
      %1587 = vmatprep.subr.mxu0 %v791
      %1588 = vmatpush2.xpose.msra.mxu0 %v790
      %1589 = vmatprep.subr.mxu0 %v785
      %1590 = vmatpush2.xpose.msra.mxu0 %v784
      %1591 = vmatprep.subr.mxu0 %v779
      %1592 = vmatpush2.xpose.msra.mxu0 %v778
      %1593 = vmatprep.subr.mxu0 %v773
      %1594 = vmatpush2.xpose.msra.mxu0 %v772
      %1595 = vmatprep.subr.mxu0 %v767
      %1596 = vmatpush2.xpose.msra.mxu0 %v766
      %1597 = vmatprep.subr.mxu0 %v761
      %1598 = vmatpush2.xpose.msra.mxu0 %v760
      %1599 = vmatprep.subr.mxu0 %v755
      %1600 = vmatpush2.xpose.msra.mxu0 %v754
      %1601 = vmatprep.mubr.f32.mxu0 %v269
      %1602 = vmatmul.mubr.f32.gmra.mxu0 %v268
      %v1603 = vpop.f32.mrf.mxu0
      %v1604 = vadd.f32 %v1533, %v1603
      %v1605 = vpop.f32.mrf.mxu0
      %v1606 = vadd.f32 %v1535, %v1605
      %1607 = vdwg.mxu0
      %1608 = vmatprep.subr.mxu0 %v751
      %1609 = vmatpush1.xpose.msra.mxu0 %v750
      %1610 = vmatprep.subr.mxu0 %v745
      %1611 = vmatpush1.xpose.msra.mxu0 %v744
      %1612 = vmatprep.subr.mxu0 %v739
      %1613 = vmatpush1.xpose.msra.mxu0 %v738
      %1614 = vmatprep.subr.mxu0 %v733
      %1615 = vmatpush1.xpose.msra.mxu0 %v732
      %1616 = vmatprep.subr.mxu0 %v727
      %1617 = vmatpush1.xpose.msra.mxu0 %v726
      %1618 = vmatprep.subr.mxu0 %v721
      %1619 = vmatpush1.xpose.msra.mxu0 %v720
      %1620 = vmatprep.subr.mxu0 %v715
      %1621 = vmatpush1.xpose.msra.mxu0 %v714
      %1622 = vmatprep.subr.mxu0 %v709
      %1623 = vmatpush1.xpose.msra.mxu0 %v708
      %1624 = vmatprep.subr.mxu0 %v703
      %1625 = vmatpush1.xpose.msra.mxu0 %v702
      %1626 = vmatprep.subr.mxu0 %v697
      %1627 = vmatpush1.xpose.msra.mxu0 %v696
      %1628 = vmatprep.subr.mxu0 %v691
      %1629 = vmatpush1.xpose.msra.mxu0 %v690
      %1630 = vmatprep.subr.mxu0 %v685
      %1631 = vmatpush1.xpose.msra.mxu0 %v684
      %1632 = vmatprep.subr.mxu0 %v679
      %1633 = vmatpush1.xpose.msra.mxu0 %v678
      %1634 = vmatprep.subr.mxu0 %v673
      %1635 = vmatpush1.xpose.msra.mxu0 %v672
      %1636 = vmatprep.subr.mxu0 %v667
      %1637 = vmatpush1.xpose.msra.mxu0 %v666
      %1638 = vmatprep.subr.mxu0 %v661
      %1639 = vmatpush1.xpose.msra.mxu0 %v660
      %1640 = vmatprep.subr.mxu0 %v847
      %1641 = vmatpush2.xpose.msra.mxu0 %v846
      %1642 = vmatprep.subr.mxu0 %v841
      %1643 = vmatpush2.xpose.msra.mxu0 %v840
      %1644 = vmatprep.subr.mxu0 %v835
      %1645 = vmatpush2.xpose.msra.mxu0 %v834
      %1646 = vmatprep.subr.mxu0 %v829
      %1647 = vmatpush2.xpose.msra.mxu0 %v828
      %1648 = vmatprep.subr.mxu0 %v823
      %1649 = vmatpush2.xpose.msra.mxu0 %v822
      %1650 = vmatprep.subr.mxu0 %v817
      %1651 = vmatpush2.xpose.msra.mxu0 %v816
      %1652 = vmatprep.subr.mxu0 %v811
      %1653 = vmatpush2.xpose.msra.mxu0 %v810
      %1654 = vmatprep.subr.mxu0 %v805
      %1655 = vmatpush2.xpose.msra.mxu0 %v804
      %1656 = vmatprep.subr.mxu0 %v799
      %1657 = vmatpush2.xpose.msra.mxu0 %v798
      %1658 = vmatprep.subr.mxu0 %v793
      %1659 = vmatpush2.xpose.msra.mxu0 %v792
      %1660 = vmatprep.subr.mxu0 %v787
      %1661 = vmatpush2.xpose.msra.mxu0 %v786
      %1662 = vmatprep.subr.mxu0 %v781
      %1663 = vmatpush2.xpose.msra.mxu0 %v780
      %1664 = vmatprep.subr.mxu0 %v775
      %1665 = vmatpush2.xpose.msra.mxu0 %v774
      %1666 = vmatprep.subr.mxu0 %v769
      %1667 = vmatpush2.xpose.msra.mxu0 %v768
      %1668 = vmatprep.subr.mxu0 %v763
      %1669 = vmatpush2.xpose.msra.mxu0 %v762
      %1670 = vmatprep.subr.mxu0 %v757
      %1671 = vmatpush2.xpose.msra.mxu0 %v756
      %1672 = vmatprep.mubr.f32.mxu0 %v271
      %1673 = vmatmul.mubr.f32.gmra.mxu0 %v270
      %v1674 = vpop.f32.mrf.mxu0
      %v1675 = vadd.f32 %v1604, %v1674
      %v1676 = vpop.f32.mrf.mxu0
      %v1677 = vadd.f32 %v1606, %v1676
      %1678 = vdwg.mxu0
      %1679 = vmatprep.subr.mxu0 %v939
      %1680 = vmatpush1.xpose.msra.mxu0 %v938
      %1681 = vmatprep.subr.mxu0 %v933
      %1682 = vmatpush1.xpose.msra.mxu0 %v932
      %1683 = vmatprep.subr.mxu0 %v927
      %1684 = vmatpush1.xpose.msra.mxu0 %v926
      %1685 = vmatprep.subr.mxu0 %v921
      %1686 = vmatpush1.xpose.msra.mxu0 %v920
      %1687 = vmatprep.subr.mxu0 %v915
      %1688 = vmatpush1.xpose.msra.mxu0 %v914
      %1689 = vmatprep.subr.mxu0 %v909
      %1690 = vmatpush1.xpose.msra.mxu0 %v908
      %1691 = vmatprep.subr.mxu0 %v903
      %1692 = vmatpush1.xpose.msra.mxu0 %v902
      %1693 = vmatprep.subr.mxu0 %v897
      %1694 = vmatpush1.xpose.msra.mxu0 %v896
      %1695 = vmatprep.subr.mxu0 %v891
      %1696 = vmatpush1.xpose.msra.mxu0 %v890
      %1697 = vmatprep.subr.mxu0 %v885
      %1698 = vmatpush1.xpose.msra.mxu0 %v884
      %1699 = vmatprep.subr.mxu0 %v879
      %1700 = vmatpush1.xpose.msra.mxu0 %v878
      %1701 = vmatprep.subr.mxu0 %v873
      %1702 = vmatpush1.xpose.msra.mxu0 %v872
      %1703 = vmatprep.subr.mxu0 %v867
      %1704 = vmatpush1.xpose.msra.mxu0 %v866
      %1705 = vmatprep.subr.mxu0 %v861
      %1706 = vmatpush1.xpose.msra.mxu0 %v860
      %1707 = vmatprep.subr.mxu0 %v855
      %1708 = vmatpush1.xpose.msra.mxu0 %v854
      %1709 = vmatprep.subr.mxu0 %v849
      %1710 = vmatpush1.xpose.msra.mxu0 %v848
      %1711 = vmatprep.subr.mxu0 %v1035
      %1712 = vmatpush2.xpose.msra.mxu0 %v1034
      %1713 = vmatprep.subr.mxu0 %v1029
      %1714 = vmatpush2.xpose.msra.mxu0 %v1028
      %1715 = vmatprep.subr.mxu0 %v1023
      %1716 = vmatpush2.xpose.msra.mxu0 %v1022
      %1717 = vmatprep.subr.mxu0 %v1017
      %1718 = vmatpush2.xpose.msra.mxu0 %v1016
      %1719 = vmatprep.subr.mxu0 %v1011
      %1720 = vmatpush2.xpose.msra.mxu0 %v1010
      %1721 = vmatprep.subr.mxu0 %v1005
      %1722 = vmatpush2.xpose.msra.mxu0 %v1004
      %1723 = vmatprep.subr.mxu0 %v999
      %1724 = vmatpush2.xpose.msra.mxu0 %v998
      %1725 = vmatprep.subr.mxu0 %v993
      %1726 = vmatpush2.xpose.msra.mxu0 %v992
      %1727 = vmatprep.subr.mxu0 %v987
      %1728 = vmatpush2.xpose.msra.mxu0 %v986
      %1729 = vmatprep.subr.mxu0 %v981
      %1730 = vmatpush2.xpose.msra.mxu0 %v980
      %1731 = vmatprep.subr.mxu0 %v975
      %1732 = vmatpush2.xpose.msra.mxu0 %v974
      %1733 = vmatprep.subr.mxu0 %v969
      %1734 = vmatpush2.xpose.msra.mxu0 %v968
      %1735 = vmatprep.subr.mxu0 %v963
      %1736 = vmatpush2.xpose.msra.mxu0 %v962
      %1737 = vmatprep.subr.mxu0 %v957
      %1738 = vmatpush2.xpose.msra.mxu0 %v956
      %1739 = vmatprep.subr.mxu0 %v951
      %1740 = vmatpush2.xpose.msra.mxu0 %v950
      %1741 = vmatprep.subr.mxu0 %v945
      %1742 = vmatpush2.xpose.msra.mxu0 %v944
      %1743 = vmatprep.mubr.f32.mxu0 %v267
      %1744 = vmatmul.mubr.f32.gmra.mxu0 %v266
      %v1745 = vpop.f32.mrf.mxu0
      %v1746 = vadd.f32 0.0, %v1745
      %v1747 = vpop.f32.mrf.mxu0
      %v1748 = vadd.f32 0.0, %v1747
      %1749 = vdwg.mxu0
      %1750 = vmatprep.subr.mxu0 %v941
      %1751 = vmatpush1.xpose.msra.mxu0 %v940
      %1752 = vmatprep.subr.mxu0 %v935
      %1753 = vmatpush1.xpose.msra.mxu0 %v934
      %1754 = vmatprep.subr.mxu0 %v929
      %1755 = vmatpush1.xpose.msra.mxu0 %v928
      %1756 = vmatprep.subr.mxu0 %v923
      %1757 = vmatpush1.xpose.msra.mxu0 %v922
      %1758 = vmatprep.subr.mxu0 %v917
      %1759 = vmatpush1.xpose.msra.mxu0 %v916
      %1760 = vmatprep.subr.mxu0 %v911
      %1761 = vmatpush1.xpose.msra.mxu0 %v910
      %1762 = vmatprep.subr.mxu0 %v905
      %1763 = vmatpush1.xpose.msra.mxu0 %v904
      %1764 = vmatprep.subr.mxu0 %v899
      %1765 = vmatpush1.xpose.msra.mxu0 %v898
      %1766 = vmatprep.subr.mxu0 %v893
      %1767 = vmatpush1.xpose.msra.mxu0 %v892
      %1768 = vmatprep.subr.mxu0 %v887
      %1769 = vmatpush1.xpose.msra.mxu0 %v886
      %1770 = vmatprep.subr.mxu0 %v881
      %1771 = vmatpush1.xpose.msra.mxu0 %v880
      %1772 = vmatprep.subr.mxu0 %v875
      %1773 = vmatpush1.xpose.msra.mxu0 %v874
      %1774 = vmatprep.subr.mxu0 %v869
      %1775 = vmatpush1.xpose.msra.mxu0 %v868
      %1776 = vmatprep.subr.mxu0 %v863
      %1777 = vmatpush1.xpose.msra.mxu0 %v862
      %1778 = vmatprep.subr.mxu0 %v857
      %1779 = vmatpush1.xpose.msra.mxu0 %v856
      %1780 = vmatprep.subr.mxu0 %v851
      %1781 = vmatpush1.xpose.msra.mxu0 %v850
      %1782 = vmatprep.subr.mxu0 %v1037
      %1783 = vmatpush2.xpose.msra.mxu0 %v1036
      %1784 = vmatprep.subr.mxu0 %v1031
      %1785 = vmatpush2.xpose.msra.mxu0 %v1030
      %1786 = vmatprep.subr.mxu0 %v1025
      %1787 = vmatpush2.xpose.msra.mxu0 %v1024
      %1788 = vmatprep.subr.mxu0 %v1019
      %1789 = vmatpush2.xpose.msra.mxu0 %v1018
      %1790 = vmatprep.subr.mxu0 %v1013
      %1791 = vmatpush2.xpose.msra.mxu0 %v1012
      %1792 = vmatprep.subr.mxu0 %v1007
      %1793 = vmatpush2.xpose.msra.mxu0 %v1006
      %1794 = vmatprep.subr.mxu0 %v1001
      %1795 = vmatpush2.xpose.msra.mxu0 %v1000
      %1796 = vmatprep.subr.mxu0 %v995
      %1797 = vmatpush2.xpose.msra.mxu0 %v994
      %1798 = vmatprep.subr.mxu0 %v989
      %1799 = vmatpush2.xpose.msra.mxu0 %v988
      %1800 = vmatprep.subr.mxu0 %v983
      %1801 = vmatpush2.xpose.msra.mxu0 %v982
      %1802 = vmatprep.subr.mxu0 %v977
      %1803 = vmatpush2.xpose.msra.mxu0 %v976
      %1804 = vmatprep.subr.mxu0 %v971
      %1805 = vmatpush2.xpose.msra.mxu0 %v970
      %1806 = vmatprep.subr.mxu0 %v965
      %1807 = vmatpush2.xpose.msra.mxu0 %v964
      %1808 = vmatprep.subr.mxu0 %v959
      %1809 = vmatpush2.xpose.msra.mxu0 %v958
      %1810 = vmatprep.subr.mxu0 %v953
      %1811 = vmatpush2.xpose.msra.mxu0 %v952
      %1812 = vmatprep.subr.mxu0 %v947
      %1813 = vmatpush2.xpose.msra.mxu0 %v946
      %1814 = vmatprep.mubr.f32.mxu0 %v269
      %1815 = vmatmul.mubr.f32.gmra.mxu0 %v268
      %v1816 = vpop.f32.mrf.mxu0
      %v1817 = vadd.f32 %v1746, %v1816
      %v1818 = vpop.f32.mrf.mxu0
      %v1819 = vadd.f32 %v1748, %v1818
      %1820 = vdwg.mxu0
      %1821 = vmatprep.subr.mxu0 %v943
      %1822 = vmatpush1.xpose.msra.mxu0 %v942
      %1823 = vmatprep.subr.mxu0 %v937
      %1824 = vmatpush1.xpose.msra.mxu0 %v936
      %1825 = vmatprep.subr.mxu0 %v931
      %1826 = vmatpush1.xpose.msra.mxu0 %v930
      %1827 = vmatprep.subr.mxu0 %v925
      %1828 = vmatpush1.xpose.msra.mxu0 %v924
      %1829 = vmatprep.subr.mxu0 %v919
      %1830 = vmatpush1.xpose.msra.mxu0 %v918
      %1831 = vmatprep.subr.mxu0 %v913
      %1832 = vmatpush1.xpose.msra.mxu0 %v912
      %1833 = vmatprep.subr.mxu0 %v907
      %1834 = vmatpush1.xpose.msra.mxu0 %v906
      %1835 = vmatprep.subr.mxu0 %v901
      %1836 = vmatpush1.xpose.msra.mxu0 %v900
      %1837 = vmatprep.subr.mxu0 %v895
      %1838 = vmatpush1.xpose.msra.mxu0 %v894
      %1839 = vmatprep.subr.mxu0 %v889
      %1840 = vmatpush1.xpose.msra.mxu0 %v888
      %1841 = vmatprep.subr.mxu0 %v883
      %1842 = vmatpush1.xpose.msra.mxu0 %v882
      %1843 = vmatprep.subr.mxu0 %v877
      %1844 = vmatpush1.xpose.msra.mxu0 %v876
      %1845 = vmatprep.subr.mxu0 %v871
      %1846 = vmatpush1.xpose.msra.mxu0 %v870
      %1847 = vmatprep.subr.mxu0 %v865
      %1848 = vmatpush1.xpose.msra.mxu0 %v864
      %1849 = vmatprep.subr.mxu0 %v859
      %1850 = vmatpush1.xpose.msra.mxu0 %v858
      %1851 = vmatprep.subr.mxu0 %v853
      %1852 = vmatpush1.xpose.msra.mxu0 %v852
      %1853 = vmatprep.subr.mxu0 %v1039
      %1854 = vmatpush2.xpose.msra.mxu0 %v1038
      %1855 = vmatprep.subr.mxu0 %v1033
      %1856 = vmatpush2.xpose.msra.mxu0 %v1032
      %1857 = vmatprep.subr.mxu0 %v1027
      %1858 = vmatpush2.xpose.msra.mxu0 %v1026
      %1859 = vmatprep.subr.mxu0 %v1021
      %1860 = vmatpush2.xpose.msra.mxu0 %v1020
      %1861 = vmatprep.subr.mxu0 %v1015
      %1862 = vmatpush2.xpose.msra.mxu0 %v1014
      %1863 = vmatprep.subr.mxu0 %v1009
      %1864 = vmatpush2.xpose.msra.mxu0 %v1008
      %1865 = vmatprep.subr.mxu0 %v1003
      %1866 = vmatpush2.xpose.msra.mxu0 %v1002
      %1867 = vmatprep.subr.mxu0 %v997
      %1868 = vmatpush2.xpose.msra.mxu0 %v996
      %1869 = vmatprep.subr.mxu0 %v991
      %1870 = vmatpush2.xpose.msra.mxu0 %v990
      %1871 = vmatprep.subr.mxu0 %v985
      %1872 = vmatpush2.xpose.msra.mxu0 %v984
      %1873 = vmatprep.subr.mxu0 %v979
      %1874 = vmatpush2.xpose.msra.mxu0 %v978
      %1875 = vmatprep.subr.mxu0 %v973
      %1876 = vmatpush2.xpose.msra.mxu0 %v972
      %1877 = vmatprep.subr.mxu0 %v967
      %1878 = vmatpush2.xpose.msra.mxu0 %v966
      %1879 = vmatprep.subr.mxu0 %v961
      %1880 = vmatpush2.xpose.msra.mxu0 %v960
      %1881 = vmatprep.subr.mxu0 %v955
      %1882 = vmatpush2.xpose.msra.mxu0 %v954
      %1883 = vmatprep.subr.mxu0 %v949
      %1884 = vmatpush2.xpose.msra.mxu0 %v948
      %1885 = vmatprep.mubr.f32.mxu0 %v271
      %1886 = vmatmul.mubr.f32.gmra.mxu0 %v270
      %v1887 = vpop.f32.mrf.mxu0
      %v1888 = vadd.f32 %v1817, %v1887
      %v1889 = vpop.f32.mrf.mxu0
      %v1890 = vadd.f32 %v1819, %v1889
      %1891 = vdwg.mxu0
      %v1892 = vadd.f32 %v258, %v1249
      %v1893 = vadd.f32 %v259, %v1251
      %v1894 = vadd.f32 %v260, %v1462
      %v1895 = vadd.f32 %v261, %v1464
      %v1896 = vadd.f32 %v262, %v1675
      %v1897 = vadd.f32 %v263, %v1677
      %v1898 = vadd.f32 %v264, %v1888
      %v1899 = vadd.f32 %v265, %v1890
      %1900 = vst [vmem:[#allocation2] sm:$0xff] %v1892
      %1901 = vst [vmem:[#allocation2 + $0x8] sm:$0xff] %v1893
      %1902 = vst [vmem:[#allocation2 + $0x10] sm:$0xff] %v1894
      %1903 = vst [vmem:[#allocation2 + $0x18] sm:$0xff] %v1895
      %1904 = vst [vmem:[#allocation2 + $0x20] sm:$0xff] %v1896
      %1905 = vst [vmem:[#allocation2 + $0x28] sm:$0xff] %v1897
      %1906 = vst [vmem:[#allocation2 + $0x30] sm:$0xff] %v1898
      %1907 = vst [vmem:[#allocation2 + $0x38] sm:$0xff] %v1899
      // Predicated region
      $region37: #{encode_bs.1} parent=31 // pred_check
        %p1908 = pneg %p246
      $region38: #{encode_bs.1} parent=31 // pred_check_branch
        %1910 = sbr.rel (%p1908) target = $region40
      $region39: #{encode_bs.1} parent=31 // pred_region
        %v1911 = vld [vmem:[#allocation2] sm:$0xff]
        %v1912 = vld [vmem:[#allocation2 + $0x8] sm:$0xff]
        %v1913 = vld [vmem:[#allocation2 + $0x10] sm:$0xff]
        %v1914 = vld [vmem:[#allocation2 + $0x18] sm:$0xff]
        %v1915 = vld [vmem:[#allocation2 + $0x20] sm:$0xff]
        %v1916 = vld [vmem:[#allocation2 + $0x28] sm:$0xff]
        %v1917 = vld [vmem:[#allocation2 + $0x30] sm:$0xff]
        %v1918 = vld [vmem:[#allocation2 + $0x38] sm:$0xff]
        %v1919 = vld [vmem:[%s238] sm:$0xff]
        %v1921 = vlaneseq
        %v1922 = vshrl.u32 %v1921, 7
        %v1923 = vsub.s32 0, %v1922
        %v1924 = vrot.slane %v1919, %v1923
        %v1925 = vlaneseq
        %v1926 = vshrl.u32 %v1925, 7
        %v1927 = vsub.s32 1, %v1926
        %v1928 = vrot.slane %v1919, %v1927
        %v1929 = vlaneseq
        %v1930 = vshrl.u32 %v1929, 7
        %v1931 = vsub.s32 2, %v1930
        %v1932 = vrot.slane %v1919, %v1931
        %v1933 = vlaneseq
        %v1934 = vshrl.u32 %v1933, 7
        %v1935 = vsub.s32 3, %v1934
        %v1936 = vrot.slane %v1919, %v1935
        %v1937 = vlaneseq
        %v1938 = vshrl.u32 %v1937, 7
        %v1939 = vsub.s32 4, %v1938
        %v1940 = vrot.slane %v1919, %v1939
        %v1941 = vlaneseq
        %v1942 = vshrl.u32 %v1941, 7
        %v1943 = vsub.s32 5, %v1942
        %v1944 = vrot.slane %v1919, %v1943
        %v1945 = vlaneseq
        %v1946 = vshrl.u32 %v1945, 7
        %v1947 = vsub.s32 6, %v1946
        %v1948 = vrot.slane %v1919, %v1947
        %v1949 = vlaneseq
        %v1950 = vshrl.u32 %v1949, 7
        %v1951 = vsub.s32 7, %v1950
        %v1952 = vrot.slane %v1919, %v1951
        %v1961 = vadd.f32 %v1911, %v1924
        %v1962 = vadd.f32 %v1912, %v1928
        %v1963 = vadd.f32 %v1913, %v1932
        %v1964 = vadd.f32 %v1914, %v1936
        %v1965 = vadd.f32 %v1915, %v1940
        %v1966 = vadd.f32 %v1916, %v1944
        %v1967 = vadd.f32 %v1917, %v1948
        %v1968 = vadd.f32 %v1918, %v1952
        %v1969 = vmax.f32 %v1961, 0.0
        %v1970 = vmax.f32 %v1962, 0.0
        %v1971 = vmax.f32 %v1963, 0.0
        %v1972 = vmax.f32 %v1964, 0.0
        %v1973 = vmax.f32 %v1965, 0.0
        %v1974 = vmax.f32 %v1966, 0.0
        %v1975 = vmax.f32 %v1967, 0.0
        %v1976 = vmax.f32 %v1968, 0.0
        %1977 = vst [vmem:[%s244] sm:$0xff] %v1969
        %1978 = vst [vmem:[%s244 + $0x8] sm:$0xff] %v1970
        %1979 = vst [vmem:[%s244 + $0x10] sm:$0xff] %v1971
        %1980 = vst [vmem:[%s244 + $0x18] sm:$0xff] %v1972
        %1981 = vst [vmem:[%s244 + $0x20] sm:$0xff] %v1973
        %1982 = vst [vmem:[%s244 + $0x28] sm:$0xff] %v1974
        %1983 = vst [vmem:[%s244 + $0x30] sm:$0xff] %v1975
        %1984 = vst [vmem:[%s244 + $0x38] sm:$0xff] %v1976
      $region40: #{encode_bs.1} parent=31 // pred_fallthru
        _
      %s1985 = smul.u32 8, %s18
      %p1986 = scmp.lt.s32.totalorder %s1985, 63
      %s1987 = scalar_select %p1986, %s1985, 63
      %s1988 = smul.addr %s1987, 8
      %s1989 = scalar_lea.vmem %s3, %s1988
      // Predicated region
      $region41: #{encode_bs.1} parent=31 // pred_check
        %p1990 = pneg %p124
      $region42: #{encode_bs.1} parent=31 // pred_check_branch
        %1992 = sbr.rel (%p1990) target = $region44
      $region43: #{encode_bs.1} parent=31 // pred_region
        %s1993 = smul.u32 8, %s18
      $region44: #{encode_bs.1} parent=31 // pred_fallthru
        _
    $region32: #{encode_bs.1} parent=5 // pred_fallthru
      _
    %p1994 = scmp.le.s32.totalorder 2, %s9
    // Predicated region
    $region45: #{encode_bs.1} parent=5 // pred_check
      %p1995 = pneg %p1994
    $region46: #{encode_bs.1} parent=5 // pred_check_branch
      %1997 = sbr.rel (%p1995) target = $region48
    $region47: #{encode_bs.1} parent=5 // pred_region
      %s1998 = ssub.s32 %s9, 2
      // Predicated region
      $region49: #{encode_bs.1} parent=47 // pred_check
        %p1999 = pneg %p130
      $region50: #{encode_bs.1} parent=47 // pred_check_branch
        %2001 = sbr.rel (%p1999) target = $region52
      $region51: #{encode_bs.1} parent=47 // pred_region
        %s2002 = smul.u32 8, %s20
        %p2003 = scmp.lt.s32.totalorder %s2002, 63
        %s2004 = scalar_select %p2003, %s2002, 63
        %s2005 = smul.addr %s2004, 8
        %s2006 = scalar_lea.vmem %s3, %s2005
      $region52: #{encode_bs.1} parent=47 // pred_fallthru
        _
    $region48: #{encode_bs.1} parent=5 // pred_fallthru
      _
  $region6: #{encode_bs.1} parent=0 // loop_footer
    %s13 = sadd.s32 1, %s9
  $region7: #{encode_bs.1} parent=0 // loop_footer_branch
    %8 = sbr.rel target = $region3
  $region8: #{encode_bs.1} parent=0 // loop_exit
    _

</llo_original>
